<compile_context>
chip_gen: v5e
topology: v5e:2x2
jax: 0.10.0
libtpu: 0.0.40
codegen_flags: <defaults>
</compile_context>

<pallas_src>
import math
import functools

import jax
import jax.numpy as jnp
from jax.experimental import pallas as pl
from jax.experimental.pallas import tpu as pltpu


_VMEM_LIMIT = 64 * 1024 * 1024


def _choose_tile_m(M, target=256):
    # target is a multiple of 8 (sublane); partial last row-tile is fine (no reduction over M).
    return M if M <= target else target


def _choose_tile_n(N, target=512):
    # target is a multiple of 128 (lane); partial last col-tile is fine (no reduction over N).
    return N if N <= target else target


def _choose_tile_f(F):
    # F is a reduction (contraction) axis -> the tile must divide F exactly.
    for t in (512, 256, 128):
        if F % t == 0:
            return t
    return F


# ----------------------------- Pallas kernels -----------------------------

def _norm_qkv_kernel(x_ref, nw_ref, w_ref, b_ref, o_ref, *, eps):
    """RMSNorm(x) fused with one (Q|K|V) projection tile."""
    x = x_ref[...]
    inv = jax.lax.rsqrt(jnp.mean(x * x, axis=-1, keepdims=True) + eps)
    xn = (x * inv * nw_ref[...]).astype(jnp.bfloat16)
    o_ref[...] = jnp.dot(xn, w_ref[...],
                         preferred_element_type=jnp.float32) + b_ref[...]


def fused_norm_qkv(x, norm_w, wqkv, bqkv, *, eps=1e-6):
    M, D = x.shape
    N = wqkv.shape[1]
    tm, tn = _choose_tile_m(M), _choose_tile_n(N)
    return pl.pallas_call(
        functools.partial(_norm_qkv_kernel, eps=eps),
        out_shape=jax.ShapeDtypeStruct((M, N), jnp.float32),
        grid=(pl.cdiv(M, tm), pl.cdiv(N, tn)),
        in_specs=[pl.BlockSpec((tm, D), lambda i, j: (i, 0)),
                  pl.BlockSpec((1, D), lambda i, j: (0, 0)),
                  pl.BlockSpec((D, tn), lambda i, j: (0, j)),
                  pl.BlockSpec((1, tn), lambda i, j: (0, j))],
        out_specs=pl.BlockSpec((tm, tn), lambda i, j: (i, j)),
        compiler_params=pltpu.CompilerParams(
            dimension_semantics=("parallel", "parallel"),
            vmem_limit_bytes=_VMEM_LIMIT),
    )(x, norm_w.reshape(1, D), wqkv, bqkv.reshape(1, N))


def _proj_kernel(a_ref, w_ref, b_ref, g_ref, r_ref, o_ref):
    y = jnp.dot(a_ref[...].astype(jnp.bfloat16), w_ref[...],
                preferred_element_type=jnp.float32) + b_ref[...]
    o_ref[...] = r_ref[...] + g_ref[...] * y


def proj_scale_residual(a, w, b, gamma, residual):
    """out = residual + gamma * (a @ w + b); residual aliased to the output buffer."""
    M, K = a.shape
    N = w.shape[1]
    tm, tn = _choose_tile_m(M), _choose_tile_n(N)
    return pl.pallas_call(
        _proj_kernel,
        out_shape=jax.ShapeDtypeStruct((M, N), jnp.float32),
        grid=(pl.cdiv(M, tm), pl.cdiv(N, tn)),
        in_specs=[pl.BlockSpec((tm, K), lambda i, j: (i, 0)),
                  pl.BlockSpec((K, tn), lambda i, j: (0, j)),
                  pl.BlockSpec((1, tn), lambda i, j: (0, j)),
                  pl.BlockSpec((1, tn), lambda i, j: (0, j)),
                  pl.BlockSpec((tm, tn), lambda i, j: (i, j))],
        out_specs=pl.BlockSpec((tm, tn), lambda i, j: (i, j)),
        input_output_aliases={4: 0},
        compiler_params=pltpu.CompilerParams(
            dimension_semantics=("parallel", "parallel"),
            vmem_limit_bytes=_VMEM_LIMIT),
    )(a, w, b.reshape(1, N), gamma.reshape(1, N), residual)


def _norm_ffn_kernel(x_ref, nw_ref, w1_ref, b1_ref, w2_ref, b2_ref,
                     w3_ref, b3_ref, g_ref, o_ref, xn_ref, acc_ref, *, eps):
    """RMSNorm(x) fused with SwiGLU FFN, chunked over the hidden dim F (grid axis 1)."""
    f = pl.program_id(1)

    @pl.when(f == 0)
    def _():
        x = x_ref[...]
        inv = jax.lax.rsqrt(jnp.mean(x * x, axis=-1, keepdims=True) + eps)
        xn_ref[...] = (x * inv * nw_ref[...]).astype(jnp.bfloat16)
        acc_ref[...] = jnp.zeros_like(acc_ref)

    xn = xn_ref[...]
    h1 = jnp.dot(xn, w1_ref[...], preferred_element_type=jnp.float32) + b1_ref[...]
    h2 = jnp.dot(xn, w2_ref[...], preferred_element_type=jnp.float32) + b2_ref[...]
    gated = (h1 * jax.nn.sigmoid(h2)).astype(jnp.bfloat16)
    acc_ref[...] += jnp.dot(gated, w3_ref[...], preferred_element_type=jnp.float32)

    @pl.when(f == pl.num_programs(1) - 1)
    def _():
        o_ref[...] = x_ref[...] + g_ref[...] * (acc_ref[...] + b3_ref[...])


def fused_norm_ffn(x, norm_w, w1, b1, w2, b2, w3, b3, gamma, *, eps=1e-6):
    """out = x + gamma * (SwiGLU(RMSNorm(x)) @ w3 + b3); x aliased to the output buffer."""
    M, D = x.shape
    F = w1.shape[1]
    tm, tf = _choose_tile_m(M), _choose_tile_f(F)
    return pl.pallas_call(
        functools.partial(_norm_ffn_kernel, eps=eps),
        out_shape=jax.ShapeDtypeStruct((M, D), jnp.float32),
        grid=(pl.cdiv(M, tm), F // tf),
        in_specs=[pl.BlockSpec((tm, D), lambda i, f: (i, 0)),
                  pl.BlockSpec((1, D), lambda i, f: (0, 0)),
                  pl.BlockSpec((D, tf), lambda i, f: (0, f)),
                  pl.BlockSpec((1, tf), lambda i, f: (0, f)),
                  pl.BlockSpec((D, tf), lambda i, f: (0, f)),
                  pl.BlockSpec((1, tf), lambda i, f: (0, f)),
                  pl.BlockSpec((tf, D), lambda i, f: (f, 0)),
                  pl.BlockSpec((1, D), lambda i, f: (0, 0)),
                  pl.BlockSpec((1, D), lambda i, f: (0, 0))],
        out_specs=pl.BlockSpec((tm, D), lambda i, f: (i, 0)),
        scratch_shapes=[pltpu.VMEM((tm, D), jnp.bfloat16),
                        pltpu.VMEM((tm, D), jnp.float32)],
        input_output_aliases={0: 0},
        compiler_params=pltpu.CompilerParams(
            dimension_semantics=("parallel", "arbitrary"),
            vmem_limit_bytes=_VMEM_LIMIT),
    )(x, norm_w.reshape(1, D), w1, b1.reshape(1, F), w2, b2.reshape(1, F),
      w3, b3.reshape(1, D), gamma.reshape(1, D))


def _rot_half(t):
    h = t.shape[-1] // 2
    return jnp.concatenate([-t[..., h:], t[..., :h]], axis=-1)


def _attn_kernel(q_ref, k_ref, v_ref, cos_ref, sin_ref, o_ref, *, scale):
    q = q_ref[...] * scale                 # (H, S, depth); fold 1/sqrt(depth) into q
    k = k_ref[...]
    v = v_ref[...].astype(jnp.bfloat16)
    cos = cos_ref[...]                     # (1, S, depth), broadcasts over heads
    sin = sin_ref[...]
    q = q * cos + _rot_half(q) * sin       # rotary in f32 (scale commutes: rotary is linear)
    k = k * cos + _rot_half(k) * sin
    logits = jnp.einsum("hqd,hkd->hqk",
                        q.astype(jnp.bfloat16), k.astype(jnp.bfloat16),
                        preferred_element_type=jnp.float32)
    m = jnp.max(logits, axis=-1, keepdims=True)
    e = jnp.exp(logits - m)
    p = e * pl.reciprocal(jnp.sum(e, axis=-1, keepdims=True), approx=True)
    o_ref[...] = jnp.einsum("hqk,hkd->hqd", p.astype(jnp.bfloat16), v,
                            preferred_element_type=jnp.float32)


def attention(qh, kh, vh, cos, sin, num_heads):
    """qh/kh/vh: (B*H, S, depth); cos/sin: (1, S, depth). All heads of a batch per step."""
    BH, S, depth = qh.shape
    B = BH // num_heads
    scale = 1.0 / math.sqrt(depth)
    return pl.pallas_call(
        functools.partial(_attn_kernel, scale=scale),
        out_shape=jax.ShapeDtypeStruct((BH, S, depth), jnp.float32),
        grid=(B,),
        in_specs=[pl.BlockSpec((num_heads, S, depth), lambda b: (b, 0, 0)),
                  pl.BlockSpec((num_heads, S, depth), lambda b: (b, 0, 0)),
                  pl.BlockSpec((num_heads, S, depth), lambda b: (b, 0, 0)),
                  pl.BlockSpec((1, S, depth), lambda b: (0, 0, 0)),
                  pl.BlockSpec((1, S, depth), lambda b: (0, 0, 0))],
        out_specs=pl.BlockSpec((num_heads, S, depth), lambda b: (b, 0, 0)),
        compiler_params=pltpu.CompilerParams(
            dimension_semantics=("parallel",),
            vmem_limit_bytes=_VMEM_LIMIT),
    )(qh, kh, vh, cos, sin)


def _rmsnorm_kernel(x_ref, w_ref, o_ref, *, eps):
    x = x_ref[...]
    inv = jax.lax.rsqrt(jnp.mean(x * x, axis=-1, keepdims=True) + eps)
    o_ref[...] = x * inv * w_ref[...]


def rmsnorm(x, w, *, eps=1e-6):
    M, D = x.shape
    tm = _choose_tile_m(M)
    return pl.pallas_call(
        functools.partial(_rmsnorm_kernel, eps=eps),
        out_shape=jax.ShapeDtypeStruct((M, D), jnp.float32),
        grid=(pl.cdiv(M, tm),),
        in_specs=[pl.BlockSpec((tm, D), lambda i: (i, 0)),
                  pl.BlockSpec((1, D), lambda i: (0, 0))],
        out_specs=pl.BlockSpec((tm, D), lambda i: (i, 0)),
        compiler_params=pltpu.CompilerParams(dimension_semantics=("parallel",)),
    )(x, w.reshape(1, D))


# --------------------------- model (glue in JAX) ---------------------------

def transformer_encoder(tokens, params, *, num_heads):
    B, S = tokens.shape
    emb_table = params["embedding"]
    D = emb_table.shape[1]
    depth = D // num_heads
    M = B * S

    # embedding lookup + scale (glue); dropout is identity at inference.
    x = jnp.take(emb_table, tokens, axis=0).reshape(M, D) * math.sqrt(D)

    cos = params["cos"][:S][None]     # (1, S, depth)
    sin = params["sin"][:S][None]

    def to_heads(t):
        return (t.reshape(B, S, num_heads, depth)
                 .transpose(0, 2, 1, 3)
                 .reshape(B * num_heads, S, depth))

    def merge_heads(t):
        return (t.reshape(B, num_heads, S, depth)
                 .transpose(0, 2, 1, 3)
                 .reshape(M, D))

    for lp in params["layers"]:
        # --- self attention block (norm1 fused into QKV projection) ---
        qkv = fused_norm_qkv(x, lp["norm1_w"], lp["wqkv"], lp["bqkv"])
        q, k, v = jnp.split(qkv, 3, axis=-1)
        a = attention(to_heads(q), to_heads(k), to_heads(v), cos, sin, num_heads)
        a = merge_heads(a)
        # out_proj + LayerScale + residual (fused, residual aliased to output)
        x = proj_scale_residual(a, lp["wo"], lp["bo"], lp["ls_attn"], x)

        # --- feed-forward block (norm2 fused into the FFN kernel) ---
        x = fused_norm_ffn(x, lp["norm2_w"], lp["w1"], lp["b1"],
                           lp["w2"], lp["b2"], lp["w3"], lp["b3"], lp["ls_ffn"])

    return rmsnorm(x, params["norm_w"]).reshape(B, S, D)


# TODO(synk): dropout layers and the optional attention mask are omitted
# (inference path with mask=None); everything else matches the PyTorch forward.


def init_params(key, d_model, num_heads, d_ff, num_layers, vocab_size, max_len):
    depth = d_model // num_heads
    keys = jax.random.split(key, 1 + num_layers)
    params = {}
    params["embedding"] = jax.random.normal(
        keys[0], (vocab_size, d_model), jnp.float32) * 0.02

    # rotary cos/sin cache, same recipe as RotaryEmbedding
    inv_freq = 1.0 / (10000.0 ** (jnp.arange(0, depth, 2, dtype=jnp.float32) / depth))
    t = jnp.arange(max_len, dtype=jnp.float32)
    freqs = jnp.einsum("i,j->ij", t, inv_freq)
    emb = jnp.concatenate([freqs, freqs], axis=-1)
    params["cos"] = jnp.cos(emb)
    params["sin"] = jnp.sin(emb)

    params["norm_w"] = jnp.ones((d_model,), jnp.float32)

    layers = []
    for l in range(num_layers):
        lk = jax.random.split(keys[1 + l], 10)

        def w(k, fan_in, fan_out):
            return jax.random.normal(k, (fan_in, fan_out), jnp.float32) * 0.02

        wq = w(lk[0], d_model, d_model)
        wk = w(lk[1], d_model, d_model)
        wv = w(lk[2], d_model, d_model)
        lp = dict(
            norm1_w=jnp.ones((d_model,), jnp.float32),
            norm2_w=jnp.ones((d_model,), jnp.float32),
            # fused QKV projection weight (bf16 for the MXU), f32 bias
            wqkv=jnp.concatenate([wq, wk, wv], axis=1).astype(jnp.bfloat16),
            bqkv=jnp.zeros((3 * d_model,), jnp.float32),
            wo=w(lk[3], d_model, d_model).astype(jnp.bfloat16),
            bo=jnp.zeros((d_model,), jnp.float32),
            ls_attn=jnp.full((d_model,), 1e-4, jnp.float32),
            w1=w(lk[4], d_model, d_ff).astype(jnp.bfloat16),
            b1=jax.random.normal(lk[5], (d_ff,), jnp.float32) * 0.02,
            w2=w(lk[6], d_model, d_ff).astype(jnp.bfloat16),
            b2=jax.random.normal(lk[7], (d_ff,), jnp.float32) * 0.02,
            w3=w(lk[8], d_ff, d_model).astype(jnp.bfloat16),
            b3=jax.random.normal(lk[9], (d_model,), jnp.float32) * 0.02,
            ls_ffn=jnp.full((d_model,), 1e-4, jnp.float32),
        )
        layers.append(lp)
    params["layers"] = layers
    return params


# ------------------------- pure-JAX reference check -------------------------

def _ref_forward(tokens, params, num_heads):
    B, S = tokens.shape
    emb_table = params["embedding"]
    D = emb_table.shape[1]
    depth = D // num_heads

    def rms(x, w, eps=1e-6):
        r = jnp.sqrt(jnp.mean(x * x, axis=-1, keepdims=True) + eps)
        return w * (x / r)

    def rot_half(x):
        h = x.shape[-1] // 2
        return jnp.concatenate([-x[..., h:], x[..., :h]], axis=-1)

    x = jnp.take(emb_table, tokens, axis=0) * math.sqrt(D)   # (B,S,D)
    cos = params["cos"][:S][None, None]
    sin = params["sin"][:S][None, None]

    for lp in params["layers"]:
        wq, wk, wv = jnp.split(lp["wqkv"].astype(jnp.float32), 3, axis=1)
        bq, bk, bv = jnp.split(lp["bqkv"], 3)
        h = rms(x, lp["norm1_w"])
        q = h @ wq + bq
        k = h @ wk + bk
        v = h @ wv + bv

        def split(t):
            return t.reshape(B, S, num_heads, depth).transpose(0, 2, 1, 3)

        q, k, v = split(q), split(k), split(v)
        q = q * cos + rot_half(q) * sin
        k = k * cos + rot_half(k) * sin
        logits = jnp.einsum("bhqd,bhkd->bhqk", q, k) / math.sqrt(depth)
        wts = jax.nn.softmax(logits, axis=-1)
        a = jnp.einsum("bhqk,bhkd->bhqd", wts, v)
        a = a.transpose(0, 2, 1, 3).reshape(B, S, D)
        x = x + lp["ls_attn"] * (a @ lp["wo"].astype(jnp.float32) + lp["bo"])

        h2 = rms(x, lp["norm2_w"])
        gated = ((h2 @ lp["w1"].astype(jnp.float32) + lp["b1"])
                 * jax.nn.sigmoid(h2 @ lp["w2"].astype(jnp.float32) + lp["b2"]))
        x = x + lp["ls_ffn"] * (gated @ lp["w3"].astype(jnp.float32) + lp["b3"])

    return rms(x, params["norm_w"])


if __name__ == "__main__":
    d_model, num_heads, d_ff, num_layers = 32, 4, 64, 2
    vocab_size, max_len = 50, 64
    B, S = 2, 8

    key = jax.random.PRNGKey(0)
    pkey, tkey = jax.random.split(key)
    params = init_params(pkey, d_model, num_heads, d_ff, num_layers,
                         vocab_size, max_len)
    tokens = jax.random.randint(tkey, (B, S), 0, vocab_size, dtype=jnp.int32)

    fwd = jax.jit(functools.partial(transformer_encoder, num_heads=num_heads))
    out = jax.block_until_ready(fwd(tokens, params))

    ref = _ref_forward(tokens, params, num_heads)
    assert out.shape == (B, S, d_model)
    assert jnp.allclose(out, ref, atol=2e-3, rtol=2e-3), "mismatch vs JAX reference"

    print("KERNEL_OK")
</pallas_src>

<mosaic_0001>
module attributes {stable_mosaic.version = 11 : i64} {
  func.func @_norm_qkv_kernel(%arg0: i32, %arg1: i32, %arg2: memref<16x32xf32, #tpu.memory_space<vmem>>, %arg3: memref<1x32xf32, #tpu.memory_space<vmem>>, %arg4: memref<32x96xbf16, #tpu.memory_space<vmem>>, %arg5: memref<1x96xf32, #tpu.memory_space<vmem>>, %arg6: memref<16x96xf32, #tpu.memory_space<vmem>>) attributes {dimension_semantics = [#tpu.dimension_semantics<parallel>, #tpu.dimension_semantics<parallel>], iteration_bounds = array<i64: 1, 1>, scalar_prefetch = 0 : i64, scratch_operands = 0 : i64, tpu.core_type = #tpu.core_type<tc>, window_params = [{transform_indices = @transform_0, window_bounds = array<i64: 16, 32>}, {pipeline_mode = #tpu.pipeline_mode<synchronous>, transform_indices = @transform_1, window_bounds = array<i64: 1, 32>}, {transform_indices = @transform_2, window_bounds = array<i64: 32, 96>}, {transform_indices = @transform_3, window_bounds = array<i64: 1, 96>}, {transform_indices = @transform_4, window_bounds = array<i64: 16, 96>}]} {
    %c0 = arith.constant 0 : index
    %c0_0 = arith.constant 0 : index
    %0 = vector.load %arg2[%c0, %c0_0] : memref<16x32xf32, #tpu.memory_space<vmem>>, vector<16x32xf32>
    %1 = arith.mulf %0, %0 : vector<16x32xf32>
    %cst = arith.constant dense<0.000000e+00> : vector<16xf32>
    %2 = vector.multi_reduction <add>, %1, %cst [1] : vector<16x32xf32> to vector<16xf32>
    %3 = vector.shape_cast %2 : vector<16xf32> to vector<16x1xf32>
    %cst_1 = arith.constant 3.200000e+01 : f32
    %4 = vector.broadcast %cst_1 : f32 to vector<16x1xf32>
    %5 = arith.divf %3, %4 : vector<16x1xf32>
    %cst_2 = arith.constant 9.99999997E-7 : f32
    %6 = vector.broadcast %cst_2 : f32 to vector<16x1xf32>
    %7 = arith.addf %5, %6 : vector<16x1xf32>
    %8 = math.rsqrt %7 : vector<16x1xf32>
    %9 = vector.broadcast %8 : vector<16x1xf32> to vector<16x32xf32>
    %10 = arith.mulf %0, %9 : vector<16x32xf32>
    %c0_3 = arith.constant 0 : index
    %c0_4 = arith.constant 0 : index
    %11 = vector.load %arg3[%c0_3, %c0_4] : memref<1x32xf32, #tpu.memory_space<vmem>>, vector<1x32xf32>
    %12 = vector.broadcast %11 : vector<1x32xf32> to vector<16x32xf32>
    %13 = arith.mulf %10, %12 : vector<16x32xf32>
    %14 = arith.truncf %13 : vector<16x32xf32> to vector<16x32xbf16>
    %c0_5 = arith.constant 0 : index
    %c0_6 = arith.constant 0 : index
    %15 = vector.load %arg4[%c0_5, %c0_6] : memref<32x96xbf16, #tpu.memory_space<vmem>>, vector<32x96xbf16>
    %cst_7 = arith.constant dense<0.000000e+00> : vector<16x96xf32>
    %16 = tpu.matmul %14, %15, %cst_7 {dimension_numbers = #tpu.dot_dimension_numbers<[1], [0], [0], [1], [0, 0, 1, 1], [], []>} : vector<16x32xbf16>, vector<32x96xbf16>, vector<16x96xf32> -> vector<16x96xf32>
    %c0_8 = arith.constant 0 : index
    %c0_9 = arith.constant 0 : index
    %17 = vector.load %arg5[%c0_8, %c0_9] : memref<1x96xf32, #tpu.memory_space<vmem>>, vector<1x96xf32>
    %18 = vector.broadcast %17 : vector<1x96xf32> to vector<16x96xf32>
    %19 = arith.addf %16, %18 : vector<16x96xf32>
    %c0_10 = arith.constant 0 : index
    %c0_11 = arith.constant 0 : index
    %20 = vector.load %arg6[%c0_10, %c0_11] : memref<16x96xf32, #tpu.memory_space<vmem>>, vector<16x96xf32>
    tpu.vector_store %arg6[%c0_10, %c0_11], %19 {strides = array<i32>} : memref<16x96xf32, #tpu.memory_space<vmem>>, vector<16x96xf32>,
    return
  }
  func.func @transform_0(%arg0: i32, %arg1: i32) -> (i32, i32) {
    %c0_i32 = arith.constant 0 : i32
    %c0_i32_0 = arith.constant 0 : i32
    return %arg0, %c0_i32 : i32, i32
  }
  func.func @transform_1(%arg0: i32, %arg1: i32) -> (i32, i32) {
    %c0_i32 = arith.constant 0 : i32
    %c0_i32_0 = arith.constant 0 : i32
    %c0_i32_1 = arith.constant 0 : i32
    return %c0_i32, %c0_i32_0 : i32, i32
  }
  func.func @transform_2(%arg0: i32, %arg1: i32) -> (i32, i32) {
    %c0_i32 = arith.constant 0 : i32
    %c0_i32_0 = arith.constant 0 : i32
    return %c0_i32, %arg1 : i32, i32
  }
  func.func @transform_3(%arg0: i32, %arg1: i32) -> (i32, i32) {
    %c0_i32 = arith.constant 0 : i32
    %c0_i32_0 = arith.constant 0 : i32
    return %c0_i32, %arg1 : i32, i32
  }
  func.func @transform_4(%arg0: i32, %arg1: i32) -> (i32, i32) {
    %c0_i32 = arith.constant 0 : i32
    return %arg0, %arg1 : i32, i32
  }
}

module attributes {stable_mosaic.version = 11 : i64} {
  func.func @_attn_kernel(%arg0: i32, %arg1: memref<4x8x8xf32, #tpu.memory_space<vmem>>, %arg2: memref<4x8x8xf32, #tpu.memory_space<vmem>>, %arg3: memref<4x8x8xf32, #tpu.memory_space<vmem>>, %arg4: memref<1x8x8xf32, #tpu.memory_space<vmem>>, %arg5: memref<1x8x8xf32, #tpu.memory_space<vmem>>, %arg6: memref<4x8x8xf32, #tpu.memory_space<vmem>>) attributes {dimension_semantics = [#tpu.dimension_semantics<parallel>], iteration_bounds = array<i64: 2>, scalar_prefetch = 0 : i64, scratch_operands = 0 : i64, tpu.core_type = #tpu.core_type<tc>, window_params = [{transform_indices = @transform_0, window_bounds = array<i64: 4, 8, 8>}, {transform_indices = @transform_1, window_bounds = array<i64: 4, 8, 8>}, {transform_indices = @transform_2, window_bounds = array<i64: 4, 8, 8>}, {pipeline_mode = #tpu.pipeline_mode<synchronous>, transform_indices = @transform_3, window_bounds = array<i64: 1, 8, 8>}, {pipeline_mode = #tpu.pipeline_mode<synchronous>, transform_indices = @transform_4, window_bounds = array<i64: 1, 8, 8>}, {transform_indices = @transform_5, window_bounds = array<i64: 4, 8, 8>}]} {
    %c0 = arith.constant 0 : index
    %c0_0 = arith.constant 0 : index
    %c0_1 = arith.constant 0 : index
    %0 = vector.load %arg1[%c0, %c0_0, %c0_1] : memref<4x8x8xf32, #tpu.memory_space<vmem>>, vector<4x8x8xf32>
    %cst = arith.constant 0.353553385 : f32
    %1 = vector.broadcast %cst : f32 to vector<4x8x8xf32>
    %2 = arith.mulf %0, %1 : vector<4x8x8xf32>
    %c0_2 = arith.constant 0 : index
    %c0_3 = arith.constant 0 : index
    %c0_4 = arith.constant 0 : index
    %3 = vector.load %arg2[%c0_2, %c0_3, %c0_4] : memref<4x8x8xf32, #tpu.memory_space<vmem>>, vector<4x8x8xf32>
    %c0_5 = arith.constant 0 : index
    %c0_6 = arith.constant 0 : index
    %c0_7 = arith.constant 0 : index
    %4 = vector.load %arg3[%c0_5, %c0_6, %c0_7] : memref<4x8x8xf32, #tpu.memory_space<vmem>>, vector<4x8x8xf32>
    %5 = arith.truncf %4 : vector<4x8x8xf32> to vector<4x8x8xbf16>
    %c0_8 = arith.constant 0 : index
    %c0_9 = arith.constant 0 : index
    %c0_10 = arith.constant 0 : index
    %6 = vector.load %arg4[%c0_8, %c0_9, %c0_10] : memref<1x8x8xf32, #tpu.memory_space<vmem>>, vector<1x8x8xf32>
    %c0_11 = arith.constant 0 : index
    %c0_12 = arith.constant 0 : index
    %c0_13 = arith.constant 0 : index
    %7 = vector.load %arg5[%c0_11, %c0_12, %c0_13] : memref<1x8x8xf32, #tpu.memory_space<vmem>>, vector<1x8x8xf32>
    %8 = vector.broadcast %6 : vector<1x8x8xf32> to vector<4x8x8xf32>
    %9 = arith.mulf %2, %8 : vector<4x8x8xf32>
    %10 = vector.extract_strided_slice %2 {offsets = [0, 0, 4], sizes = [4, 8, 4], strides = [1, 1, 1]} : vector<4x8x8xf32> to vector<4x8x4xf32>
    %cst_14 = arith.constant 0.000000e+00 : f32
    %11 = vector.broadcast %cst_14 : f32 to vector<4x8x4xf32>
    %12 = arith.subf %11, %10 : vector<4x8x4xf32>
    %13 = vector.extract_strided_slice %2 {offsets = [0, 0, 0], sizes = [4, 8, 4], strides = [1, 1, 1]} : vector<4x8x8xf32> to vector<4x8x4xf32>
    %14 = tpu.concatenate %12, %13 in 2 : vector<4x8x4xf32>, vector<4x8x4xf32> -> vector<4x8x8xf32>
    %15 = vector.broadcast %7 : vector<1x8x8xf32> to vector<4x8x8xf32>
    %16 = arith.mulf %14, %15 : vector<4x8x8xf32>
    %17 = arith.addf %9, %16 : vector<4x8x8xf32>
    %18 = vector.broadcast %6 : vector<1x8x8xf32> to vector<4x8x8xf32>
    %19 = arith.mulf %3, %18 : vector<4x8x8xf32>
    %20 = vector.extract_strided_slice %3 {offsets = [0, 0, 4], sizes = [4, 8, 4], strides = [1, 1, 1]} : vector<4x8x8xf32> to vector<4x8x4xf32>
    %cst_15 = arith.constant 0.000000e+00 : f32
    %21 = vector.broadcast %cst_15 : f32 to vector<4x8x4xf32>
    %22 = arith.subf %21, %20 : vector<4x8x4xf32>
    %23 = vector.extract_strided_slice %3 {offsets = [0, 0, 0], sizes = [4, 8, 4], strides = [1, 1, 1]} : vector<4x8x8xf32> to vector<4x8x4xf32>
    %24 = tpu.concatenate %22, %23 in 2 : vector<4x8x4xf32>, vector<4x8x4xf32> -> vector<4x8x8xf32>
    %25 = vector.broadcast %7 : vector<1x8x8xf32> to vector<4x8x8xf32>
    %26 = arith.mulf %24, %25 : vector<4x8x8xf32>
    %27 = arith.addf %19, %26 : vector<4x8x8xf32>
    %28 = arith.truncf %17 : vector<4x8x8xf32> to vector<4x8x8xbf16>
    %29 = arith.truncf %27 : vector<4x8x8xf32> to vector<4x8x8xbf16>
    "tpu.trace_start"() <{level = 10 : i32, message = "hqd,hkd->hqk"}> : () -> ()
    %cst_16 = arith.constant dense<0.000000e+00> : vector<4x8x8xf32>
    %30 = tpu.matmul %28, %29, %cst_16 {dimension_numbers = #tpu.dot_dimension_numbers<[2], [2], [1], [1], [0, 0, 0, 1, 1, 1], [0], [0]>} : vector<4x8x8xbf16>, vector<4x8x8xbf16>, vector<4x8x8xf32> -> vector<4x8x8xf32>
    "tpu.trace_stop"() : () -> ()
    %cst_17 = arith.constant dense<0xFF800000> : vector<4x8xf32>
    %31 = vector.multi_reduction <maximumf>, %30, %cst_17 [2] : vector<4x8x8xf32> to vector<4x8xf32>
    %32 = vector.shape_cast %31 : vector<4x8xf32> to vector<4x8x1xf32>
    %33 = vector.broadcast %32 : vector<4x8x1xf32> to vector<4x8x8xf32>
    %34 = arith.subf %30, %33 : vector<4x8x8xf32>
    %35 = math.exp %34 : vector<4x8x8xf32>
    %cst_18 = arith.constant dense<0.000000e+00> : vector<4x8xf32>
    %36 = vector.multi_reduction <add>, %35, %cst_18 [2] : vector<4x8x8xf32> to vector<4x8xf32>
    %37 = vector.shape_cast %36 : vector<4x8xf32> to vector<4x8x1xf32>
    %38 = tpu.reciprocal %37 {approx = true} : vector<4x8x1xf32> -> vector<4x8x1xf32>
    %39 = vector.broadcast %38 : vector<4x8x1xf32> to vector<4x8x8xf32>
    %40 = arith.mulf %35, %39 : vector<4x8x8xf32>
    %41 = arith.truncf %40 : vector<4x8x8xf32> to vector<4x8x8xbf16>
    "tpu.trace_start"() <{level = 10 : i32, message = "hqk,hkd->hqd"}> : () -> ()
    %cst_19 = arith.constant dense<0.000000e+00> : vector<4x8x8xf32>
    %42 = tpu.matmul %41, %5, %cst_19 {dimension_numbers = #tpu.dot_dimension_numbers<[2], [1], [1], [2], [0, 0, 0, 1, 1, 2], [0], [0]>} : vector<4x8x8xbf16>, vector<4x8x8xbf16>, vector<4x8x8xf32> -> vector<4x8x8xf32>
    "tpu.trace_stop"() : () -> ()
    %c0_20 = arith.constant 0 : index
    %c0_21 = arith.constant 0 : index
    %c0_22 = arith.constant 0 : index
    %43 = vector.load %arg6[%c0_20, %c0_21, %c0_22] : memref<4x8x8xf32, #tpu.memory_space<vmem>>, vector<4x8x8xf32>
    tpu.vector_store %arg6[%c0_20, %c0_21, %c0_22], %42 {strides = array<i32>} : memref<4x8x8xf32, #tpu.memory_space<vmem>>, vector<4x8x8xf32>,
    return
  }
  func.func @transform_0(%arg0: i32) -> (i32, i32, i32) {
    %c0_i32 = arith.constant 0 : i32
    %c0_i32_0 = arith.constant 0 : i32
    %c0_i32_1 = arith.constant 0 : i32
    return %arg0, %c0_i32, %c0_i32_0 : i32, i32, i32
  }
  func.func @transform_1(%arg0: i32) -> (i32, i32, i32) {
    %c0_i32 = arith.constant 0 : i32
    %c0_i32_0 = arith.constant 0 : i32
    %c0_i32_1 = arith.constant 0 : i32
    return %arg0, %c0_i32, %c0_i32_0 : i32, i32, i32
  }
  func.func @transform_2(%arg0: i32) -> (i32, i32, i32) {
    %c0_i32 = arith.constant 0 : i32
    %c0_i32_0 = arith.constant 0 : i32
    %c0_i32_1 = arith.constant 0 : i32
    return %arg0, %c0_i32, %c0_i32_0 : i32, i32, i32
  }
  func.func @transform_3(%arg0: i32) -> (i32, i32, i32) {
    %c0_i32 = arith.constant 0 : i32
    %c0_i32_0 = arith.constant 0 : i32
    %c0_i32_1 = arith.constant 0 : i32
    %c0_i32_2 = arith.constant 0 : i32
    return %c0_i32, %c0_i32_0, %c0_i32_1 : i32, i32, i32
  }
  func.func @transform_4(%arg0: i32) -> (i32, i32, i32) {
    %c0_i32 = arith.constant 0 : i32
    %c0_i32_0 = arith.constant 0 : i32
    %c0_i32_1 = arith.constant 0 : i32
    %c0_i32_2 = arith.constant 0 : i32
    return %c0_i32, %c0_i32_0, %c0_i32_1 : i32, i32, i32
  }
  func.func @transform_5(%arg0: i32) -> (i32, i32, i32) {
    %c0_i32 = arith.constant 0 : i32
    %c0_i32_0 = arith.constant 0 : i32
    %c0_i32_1 = arith.constant 0 : i32
    return %arg0, %c0_i32, %c0_i32_0 : i32, i32, i32
  }
}

module attributes {stable_mosaic.version = 11 : i64} {
  func.func @_proj_kernel(%arg0: i32, %arg1: i32, %arg2: memref<16x32xf32, #tpu.memory_space<vmem>>, %arg3: memref<32x32xbf16, #tpu.memory_space<vmem>>, %arg4: memref<1x32xf32, #tpu.memory_space<vmem>>, %arg5: memref<1x32xf32, #tpu.memory_space<vmem>>, %arg6: memref<16x32xf32, #tpu.memory_space<vmem>>, %arg7: memref<16x32xf32, #tpu.memory_space<vmem>>) attributes {dimension_semantics = [#tpu.dimension_semantics<parallel>, #tpu.dimension_semantics<parallel>], iteration_bounds = array<i64: 1, 1>, scalar_prefetch = 0 : i64, scratch_operands = 0 : i64, tpu.core_type = #tpu.core_type<tc>, window_params = [{transform_indices = @transform_0, window_bounds = array<i64: 16, 32>}, {transform_indices = @transform_1, window_bounds = array<i64: 32, 32>}, {transform_indices = @transform_2, window_bounds = array<i64: 1, 32>}, {transform_indices = @transform_3, window_bounds = array<i64: 1, 32>}, {transform_indices = @transform_4, window_bounds = array<i64: 16, 32>}, {transform_indices = @transform_5, window_bounds = array<i64: 16, 32>}]} {
    %c0 = arith.constant 0 : index
    %c0_0 = arith.constant 0 : index
    %0 = vector.load %arg2[%c0, %c0_0] : memref<16x32xf32, #tpu.memory_space<vmem>>, vector<16x32xf32>
    %1 = arith.truncf %0 : vector<16x32xf32> to vector<16x32xbf16>
    %c0_1 = arith.constant 0 : index
    %c0_2 = arith.constant 0 : index
    %2 = vector.load %arg3[%c0_1, %c0_2] : memref<32x32xbf16, #tpu.memory_space<vmem>>, vector<32x32xbf16>
    %cst = arith.constant dense<0.000000e+00> : vector<16x32xf32>
    %3 = tpu.matmul %1, %2, %cst {dimension_numbers = #tpu.dot_dimension_numbers<[1], [0], [0], [1], [0, 0, 1, 1], [], []>} : vector<16x32xbf16>, vector<32x32xbf16>, vector<16x32xf32> -> vector<16x32xf32>
    %c0_3 = arith.constant 0 : index
    %c0_4 = arith.constant 0 : index
    %4 = vector.load %arg4[%c0_3, %c0_4] : memref<1x32xf32, #tpu.memory_space<vmem>>, vector<1x32xf32>
    %5 = vector.broadcast %4 : vector<1x32xf32> to vector<16x32xf32>
    %6 = arith.addf %3, %5 : vector<16x32xf32>
    %c0_5 = arith.constant 0 : index
    %c0_6 = arith.constant 0 : index
    %7 = vector.load %arg6[%c0_5, %c0_6] : memref<16x32xf32, #tpu.memory_space<vmem>>, vector<16x32xf32>
    %c0_7 = arith.constant 0 : index
    %c0_8 = arith.constant 0 : index
    %8 = vector.load %arg5[%c0_7, %c0_8] : memref<1x32xf32, #tpu.memory_space<vmem>>, vector<1x32xf32>
    %9 = vector.broadcast %8 : vector<1x32xf32> to vector<16x32xf32>
    %10 = arith.mulf %9, %6 : vector<16x32xf32>
    %11 = arith.addf %7, %10 : vector<16x32xf32>
    %c0_9 = arith.constant 0 : index
    %c0_10 = arith.constant 0 : index
    %12 = vector.load %arg7[%c0_9, %c0_10] : memref<16x32xf32, #tpu.memory_space<vmem>>, vector<16x32xf32>
    tpu.vector_store %arg7[%c0_9, %c0_10], %11 {strides = array<i32>} : memref<16x32xf32, #tpu.memory_space<vmem>>, vector<16x32xf32>,
    return
  }
  func.func @transform_0(%arg0: i32, %arg1: i32) -> (i32, i32) {
    %c0_i32 = arith.constant 0 : i32
    %c0_i32_0 = arith.constant 0 : i32
    return %arg0, %c0_i32 : i32, i32
  }
  func.func @transform_1(%arg0: i32, %arg1: i32) -> (i32, i32) {
    %c0_i32 = arith.constant 0 : i32
    %c0_i32_0 = arith.constant 0 : i32
    return %c0_i32, %arg1 : i32, i32
  }
  func.func @transform_2(%arg0: i32, %arg1: i32) -> (i32, i32) {
    %c0_i32 = arith.constant 0 : i32
    %c0_i32_0 = arith.constant 0 : i32
    return %c0_i32, %arg1 : i32, i32
  }
  func.func @transform_3(%arg0: i32, %arg1: i32) -> (i32, i32) {
    %c0_i32 = arith.constant 0 : i32
    %c0_i32_0 = arith.constant 0 : i32
    return %c0_i32, %arg1 : i32, i32
  }
  func.func @transform_4(%arg0: i32, %arg1: i32) -> (i32, i32) {
    %c0_i32 = arith.constant 0 : i32
    return %arg0, %arg1 : i32, i32
  }
  func.func @transform_5(%arg0: i32, %arg1: i32) -> (i32, i32) {
    %c0_i32 = arith.constant 0 : i32
    return %arg0, %arg1 : i32, i32
  }
}

module attributes {stable_mosaic.version = 11 : i64} {
  func.func @_norm_ffn_kernel(%arg0: i32, %arg1: i32, %arg2: memref<16x32xf32, #tpu.memory_space<vmem>>, %arg3: memref<1x32xf32, #tpu.memory_space<vmem>>, %arg4: memref<32x64xbf16, #tpu.memory_space<vmem>>, %arg5: memref<1x64xf32, #tpu.memory_space<vmem>>, %arg6: memref<32x64xbf16, #tpu.memory_space<vmem>>, %arg7: memref<1x64xf32, #tpu.memory_space<vmem>>, %arg8: memref<64x32xbf16, #tpu.memory_space<vmem>>, %arg9: memref<1x32xf32, #tpu.memory_space<vmem>>, %arg10: memref<1x32xf32, #tpu.memory_space<vmem>>, %arg11: memref<16x32xf32, #tpu.memory_space<vmem>>, %arg12: memref<16x32xbf16, #tpu.memory_space<vmem>>, %arg13: memref<16x32xf32, #tpu.memory_space<vmem>>) attributes {dimension_semantics = [#tpu.dimension_semantics<parallel>, #tpu.dimension_semantics<arbitrary>], iteration_bounds = array<i64: 1, 1>, scalar_prefetch = 0 : i64, scratch_operands = 2 : i64, tpu.core_type = #tpu.core_type<tc>, window_params = [{transform_indices = @transform_0, window_bounds = array<i64: 16, 32>}, {pipeline_mode = #tpu.pipeline_mode<synchronous>, transform_indices = @transform_1, window_bounds = array<i64: 1, 32>}, {transform_indices = @transform_2, window_bounds = array<i64: 32, 64>}, {transform_indices = @transform_3, window_bounds = array<i64: 1, 64>}, {transform_indices = @transform_4, window_bounds = array<i64: 32, 64>}, {transform_indices = @transform_5, window_bounds = array<i64: 1, 64>}, {transform_indices = @transform_6, window_bounds = array<i64: 64, 32>}, {pipeline_mode = #tpu.pipeline_mode<synchronous>, transform_indices = @transform_7, window_bounds = array<i64: 1, 32>}, {pipeline_mode = #tpu.pipeline_mode<synchronous>, transform_indices = @transform_8, window_bounds = array<i64: 1, 32>}, {transform_indices = @transform_9, window_bounds = array<i64: 16, 32>}]} {
    %c0_i32 = arith.constant 0 : i32
    %0 = arith.cmpi eq, %arg1, %c0_i32 : i32
    %1 = arith.extui %0 : i1 to i32
    %c0_i32_0 = arith.constant 0 : i32
    %2 = arith.cmpi ne, %1, %c0_i32_0 : i32
    scf.if %2 {
      %c0_21 = arith.constant 0 : index
      %c0_22 = arith.constant 0 : index
      %29 = vector.load %arg2[%c0_21, %c0_22] : memref<16x32xf32, #tpu.memory_space<vmem>>, vector<16x32xf32>
      %30 = arith.mulf %29, %29 : vector<16x32xf32>
      %cst_23 = arith.constant dense<0.000000e+00> : vector<16xf32>
      %31 = vector.multi_reduction <add>, %30, %cst_23 [1] : vector<16x32xf32> to vector<16xf32>
      %32 = vector.shape_cast %31 : vector<16xf32> to vector<16x1xf32>
      %cst_24 = arith.constant 3.200000e+01 : f32
      %33 = vector.broadcast %cst_24 : f32 to vector<16x1xf32>
      %34 = arith.divf %32, %33 : vector<16x1xf32>
      %cst_25 = arith.constant 9.99999997E-7 : f32
      %35 = vector.broadcast %cst_25 : f32 to vector<16x1xf32>
      %36 = arith.addf %34, %35 : vector<16x1xf32>
      %37 = math.rsqrt %36 : vector<16x1xf32>
      %38 = vector.broadcast %37 : vector<16x1xf32> to vector<16x32xf32>
      %39 = arith.mulf %29, %38 : vector<16x32xf32>
      %c0_26 = arith.constant 0 : index
      %c0_27 = arith.constant 0 : index
      %40 = vector.load %arg3[%c0_26, %c0_27] : memref<1x32xf32, #tpu.memory_space<vmem>>, vector<1x32xf32>
      %41 = vector.broadcast %40 : vector<1x32xf32> to vector<16x32xf32>
      %42 = arith.mulf %39, %41 : vector<16x32xf32>
      %43 = arith.truncf %42 : vector<16x32xf32> to vector<16x32xbf16>
      %c0_28 = arith.constant 0 : index
      %c0_29 = arith.constant 0 : index
      %44 = vector.load %arg12[%c0_28, %c0_29] : memref<16x32xbf16, #tpu.memory_space<vmem>>, vector<16x32xbf16>
      tpu.vector_store %arg12[%c0_28, %c0_29], %43 {strides = array<i32>} : memref<16x32xbf16, #tpu.memory_space<vmem>>, vector<16x32xbf16>,
      %cst_30 = arith.constant 0.000000e+00 : f32
      %45 = vector.broadcast %cst_30 : f32 to vector<16x32xf32>
      %c0_31 = arith.constant 0 : index
      %c0_32 = arith.constant 0 : index
      %46 = vector.load %arg13[%c0_31, %c0_32] : memref<16x32xf32, #tpu.memory_space<vmem>>, vector<16x32xf32>
      tpu.vector_store %arg13[%c0_31, %c0_32], %45 {strides = array<i32>} : memref<16x32xf32, #tpu.memory_space<vmem>>, vector<16x32xf32>,
    } else {
    }
    %c0 = arith.constant 0 : index
    %c0_1 = arith.constant 0 : index
    %3 = vector.load %arg12[%c0, %c0_1] : memref<16x32xbf16, #tpu.memory_space<vmem>>, vector<16x32xbf16>
    %c0_2 = arith.constant 0 : index
    %c0_3 = arith.constant 0 : index
    %4 = vector.load %arg4[%c0_2, %c0_3] : memref<32x64xbf16, #tpu.memory_space<vmem>>, vector<32x64xbf16>
    %cst = arith.constant dense<0.000000e+00> : vector<16x64xf32>
    %5 = tpu.matmul %3, %4, %cst {dimension_numbers = #tpu.dot_dimension_numbers<[1], [0], [0], [1], [0, 0, 1, 1], [], []>} : vector<16x32xbf16>, vector<32x64xbf16>, vector<16x64xf32> -> vector<16x64xf32>
    %c0_4 = arith.constant 0 : index
    %c0_5 = arith.constant 0 : index
    %6 = vector.load %arg5[%c0_4, %c0_5] : memref<1x64xf32, #tpu.memory_space<vmem>>, vector<1x64xf32>
    %7 = vector.broadcast %6 : vector<1x64xf32> to vector<16x64xf32>
    %8 = arith.addf %5, %7 : vector<16x64xf32>
    %c0_6 = arith.constant 0 : index
    %c0_7 = arith.constant 0 : index
    %9 = vector.load %arg6[%c0_6, %c0_7] : memref<32x64xbf16, #tpu.memory_space<vmem>>, vector<32x64xbf16>
    %cst_8 = arith.constant dense<0.000000e+00> : vector<16x64xf32>
    %10 = tpu.matmul %3, %9, %cst_8 {dimension_numbers = #tpu.dot_dimension_numbers<[1], [0], [0], [1], [0, 0, 1, 1], [], []>} : vector<16x32xbf16>, vector<32x64xbf16>, vector<16x64xf32> -> vector<16x64xf32>
    %c0_9 = arith.constant 0 : index
    %c0_10 = arith.constant 0 : index
    %11 = vector.load %arg7[%c0_9, %c0_10] : memref<1x64xf32, #tpu.memory_space<vmem>>, vector<1x64xf32>
    %12 = vector.broadcast %11 : vector<1x64xf32> to vector<16x64xf32>
    %13 = arith.addf %10, %12 : vector<16x64xf32>
    %14 = arith.negf %13 : vector<16x64xf32>
    %15 = math.exp %14 : vector<16x64xf32>
    %cst_11 = arith.constant 1.000000e+00 : f32
    %16 = vector.broadcast %cst_11 : f32 to vector<16x64xf32>
    %17 = arith.addf %16, %15 : vector<16x64xf32>
    %18 = arith.divf %16, %17 : vector<16x64xf32>
    %19 = arith.mulf %8, %18 : vector<16x64xf32>
    %20 = arith.truncf %19 : vector<16x64xf32> to vector<16x64xbf16>
    %c0_12 = arith.constant 0 : index
    %c0_13 = arith.constant 0 : index
    %21 = vector.load %arg13[%c0_12, %c0_13] : memref<16x32xf32, #tpu.memory_space<vmem>>, vector<16x32xf32>
    %c0_14 = arith.constant 0 : index
    %c0_15 = arith.constant 0 : index
    %22 = vector.load %arg8[%c0_14, %c0_15] : memref<64x32xbf16, #tpu.memory_space<vmem>>, vector<64x32xbf16>
    %cst_16 = arith.constant dense<0.000000e+00> : vector<16x32xf32>
    %23 = tpu.matmul %20, %22, %cst_16 {dimension_numbers = #tpu.dot_dimension_numbers<[1], [0], [0], [1], [0, 0, 1, 1], [], []>} : vector<16x64xbf16>, vector<64x32xbf16>, vector<16x32xf32> -> vector<16x32xf32>
    %24 = arith.addf %21, %23 : vector<16x32xf32>
    %c0_17 = arith.constant 0 : index
    %c0_18 = arith.constant 0 : index
    %25 = vector.load %arg13[%c0_17, %c0_18] : memref<16x32xf32, #tpu.memory_space<vmem>>, vector<16x32xf32>
    tpu.vector_store %arg13[%c0_17, %c0_18], %24 {strides = array<i32>} : memref<16x32xf32, #tpu.memory_space<vmem>>, vector<16x32xf32>,
    %c0_i32_19 = arith.constant 0 : i32
    %26 = arith.cmpi eq, %arg1, %c0_i32_19 : i32
    %27 = arith.extui %26 : i1 to i32
    %c0_i32_20 = arith.constant 0 : i32
    %28 = arith.cmpi ne, %27, %c0_i32_20 : i32
    scf.if %28 {
      %c0_21 = arith.constant 0 : index
      %c0_22 = arith.constant 0 : index
      %29 = vector.load %arg2[%c0_21, %c0_22] : memref<16x32xf32, #tpu.memory_space<vmem>>, vector<16x32xf32>
      %c0_23 = arith.constant 0 : index
      %c0_24 = arith.constant 0 : index
      %30 = vector.load %arg10[%c0_23, %c0_24] : memref<1x32xf32, #tpu.memory_space<vmem>>, vector<1x32xf32>
      %c0_25 = arith.constant 0 : index
      %c0_26 = arith.constant 0 : index
      %31 = vector.load %arg13[%c0_25, %c0_26] : memref<16x32xf32, #tpu.memory_space<vmem>>, vector<16x32xf32>
      %c0_27 = arith.constant 0 : index
      %c0_28 = arith.constant 0 : index
      %32 = vector.load %arg9[%c0_27, %c0_28] : memref<1x32xf32, #tpu.memory_space<vmem>>, vector<1x32xf32>
      %33 = vector.broadcast %32 : vector<1x32xf32> to vector<16x32xf32>
      %34 = arith.addf %31, %33 : vector<16x32xf32>
      %35 = vector.broadcast %30 : vector<1x32xf32> to vector<16x32xf32>
      %36 = arith.mulf %35, %34 : vector<16x32xf32>
      %37 = arith.addf %29, %36 : vector<16x32xf32>
      %c0_29 = arith.constant 0 : index
      %c0_30 = arith.constant 0 : index
      %38 = vector.load %arg11[%c0_29, %c0_30] : memref<16x32xf32, #tpu.memory_space<vmem>>, vector<16x32xf32>
      tpu.vector_store %arg11[%c0_29, %c0_30], %37 {strides = array<i32>} : memref<16x32xf32, #tpu.memory_space<vmem>>, vector<16x32xf32>,
    } else {
    }
    return
  }
  func.func @transform_0(%arg0: i32, %arg1: i32) -> (i32, i32) {
    %c0_i32 = arith.constant 0 : i32
    %c0_i32_0 = arith.constant 0 : i32
    return %arg0, %c0_i32 : i32, i32
  }
  func.func @transform_1(%arg0: i32, %arg1: i32) -> (i32, i32) {
    %c0_i32 = arith.constant 0 : i32
    %c0_i32_0 = arith.constant 0 : i32
    %c0_i32_1 = arith.constant 0 : i32
    return %c0_i32, %c0_i32_0 : i32, i32
  }
  func.func @transform_2(%arg0: i32, %arg1: i32) -> (i32, i32) {
    %c0_i32 = arith.constant 0 : i32
    %c0_i32_0 = arith.constant 0 : i32
    return %c0_i32, %arg1 : i32, i32
  }
  func.func @transform_3(%arg0: i32, %arg1: i32) -> (i32, i32) {
    %c0_i32 = arith.constant 0 : i32
    %c0_i32_0 = arith.constant 0 : i32
    return %c0_i32, %arg1 : i32, i32
  }
  func.func @transform_4(%arg0: i32, %arg1: i32) -> (i32, i32) {
    %c0_i32 = arith.constant 0 : i32
    %c0_i32_0 = arith.constant 0 : i32
    return %c0_i32, %arg1 : i32, i32
  }
  func.func @transform_5(%arg0: i32, %arg1: i32) -> (i32, i32) {
    %c0_i32 = arith.constant 0 : i32
    %c0_i32_0 = arith.constant 0 : i32
    return %c0_i32, %arg1 : i32, i32
  }
  func.func @transform_6(%arg0: i32, %arg1: i32) -> (i32, i32) {
    %c0_i32 = arith.constant 0 : i32
    %c0_i32_0 = arith.constant 0 : i32
    return %arg1, %c0_i32 : i32, i32
  }
  func.func @transform_7(%arg0: i32, %arg1: i32) -> (i32, i32) {
    %c0_i32 = arith.constant 0 : i32
    %c0_i32_0 = arith.constant 0 : i32
    %c0_i32_1 = arith.constant 0 : i32
    return %c0_i32, %c0_i32_0 : i32, i32
  }
  func.func @transform_8(%arg0: i32, %arg1: i32) -> (i32, i32) {
    %c0_i32 = arith.constant 0 : i32
    %c0_i32_0 = arith.constant 0 : i32
    %c0_i32_1 = arith.constant 0 : i32
    return %c0_i32, %c0_i32_0 : i32, i32
  }
  func.func @transform_9(%arg0: i32, %arg1: i32) -> (i32, i32) {
    %c0_i32 = arith.constant 0 : i32
    %c0_i32_0 = arith.constant 0 : i32
    return %arg0, %c0_i32 : i32, i32
  }
}

module attributes {stable_mosaic.version = 11 : i64} {
  func.func @_rmsnorm_kernel(%arg0: i32, %arg1: memref<16x32xf32, #tpu.memory_space<vmem>>, %arg2: memref<1x32xf32, #tpu.memory_space<vmem>>, %arg3: memref<16x32xf32, #tpu.memory_space<vmem>>) attributes {dimension_semantics = [#tpu.dimension_semantics<parallel>], iteration_bounds = array<i64: 1>, scalar_prefetch = 0 : i64, scratch_operands = 0 : i64, tpu.core_type = #tpu.core_type<tc>, window_params = [{transform_indices = @transform_0, window_bounds = array<i64: 16, 32>}, {pipeline_mode = #tpu.pipeline_mode<synchronous>, transform_indices = @transform_1, window_bounds = array<i64: 1, 32>}, {transform_indices = @transform_2, window_bounds = array<i64: 16, 32>}]} {
    %c0 = arith.constant 0 : index
    %c0_0 = arith.constant 0 : index
    %0 = vector.load %arg1[%c0, %c0_0] : memref<16x32xf32, #tpu.memory_space<vmem>>, vector<16x32xf32>
    %1 = arith.mulf %0, %0 : vector<16x32xf32>
    %cst = arith.constant dense<0.000000e+00> : vector<16xf32>
    %2 = vector.multi_reduction <add>, %1, %cst [1] : vector<16x32xf32> to vector<16xf32>
    %3 = vector.shape_cast %2 : vector<16xf32> to vector<16x1xf32>
    %cst_1 = arith.constant 3.200000e+01 : f32
    %4 = vector.broadcast %cst_1 : f32 to vector<16x1xf32>
    %5 = arith.divf %3, %4 : vector<16x1xf32>
    %cst_2 = arith.constant 9.99999997E-7 : f32
    %6 = vector.broadcast %cst_2 : f32 to vector<16x1xf32>
    %7 = arith.addf %5, %6 : vector<16x1xf32>
    %8 = math.rsqrt %7 : vector<16x1xf32>
    %9 = vector.broadcast %8 : vector<16x1xf32> to vector<16x32xf32>
    %10 = arith.mulf %0, %9 : vector<16x32xf32>
    %c0_3 = arith.constant 0 : index
    %c0_4 = arith.constant 0 : index
    %11 = vector.load %arg2[%c0_3, %c0_4] : memref<1x32xf32, #tpu.memory_space<vmem>>, vector<1x32xf32>
    %12 = vector.broadcast %11 : vector<1x32xf32> to vector<16x32xf32>
    %13 = arith.mulf %10, %12 : vector<16x32xf32>
    %c0_5 = arith.constant 0 : index
    %c0_6 = arith.constant 0 : index
    %14 = vector.load %arg3[%c0_5, %c0_6] : memref<16x32xf32, #tpu.memory_space<vmem>>, vector<16x32xf32>
    tpu.vector_store %arg3[%c0_5, %c0_6], %13 {strides = array<i32>} : memref<16x32xf32, #tpu.memory_space<vmem>>, vector<16x32xf32>,
    return
  }
  func.func @transform_0(%arg0: i32) -> (i32, i32) {
    %c0_i32 = arith.constant 0 : i32
    %c0_i32_0 = arith.constant 0 : i32
    return %arg0, %c0_i32 : i32, i32
  }
  func.func @transform_1(%arg0: i32) -> (i32, i32) {
    %c0_i32 = arith.constant 0 : i32
    %c0_i32_0 = arith.constant 0 : i32
    %c0_i32_1 = arith.constant 0 : i32
    return %c0_i32, %c0_i32_0 : i32, i32
  }
  func.func @transform_2(%arg0: i32) -> (i32, i32) {
    %c0_i32 = arith.constant 0 : i32
    %c0_i32_0 = arith.constant 0 : i32
    return %arg0, %c0_i32 : i32, i32
  }
}

</mosaic_0001>

<llo_original>
// kernel: transformer_encoder.9
$region0: #{transformer_encoder.9}
  #allocation0 [shape = 'u32[]', space=smem, size = 0x4, offset = 0x4, fixed_abs, tag = 'smem constant byte address 0x4 - core index']
  #allocation1 [shape = 'u32[72,128]{1,0:T(1,128)}', space=vmem, size = 0x9000, scoped, tag = 'internal scratch']
  %s0 = inlined_call_operand.vmem [shape: f32[16,32], index: 0, kind: input, shape index: {}]
  %s1 = inlined_call_operand.vmem [shape: f32[1,32], index: 1, kind: input, shape index: {}]
  %s2 = inlined_call_operand.vmem [shape: bf16[32,96], index: 2, kind: input, shape index: {}]
  %s3 = inlined_call_operand.vmem [shape: f32[1,96], index: 3, kind: input, shape index: {}]
  %s4 = inlined_call_operand.vmem [shape: f32[16,96], index: 4, kind: output, shape index: {}]
  %s5 = sld [smem:[#allocation0]]
  $region26: #{transformer_encoder.9} parent=0
    _
  %s7 = ssub.s32 1, %s5
  %s8 = scalar_select 0, %s7, %s5
  // Predicated region
  $region2: #{transformer_encoder.9} parent=0 // pred_check
    _
  $region3: #{transformer_encoder.9} parent=0 // pred_check_branch
    %10 = sbr.rel (0) target = $region5
  $region4: #{transformer_encoder.9} parent=0 // pred_region
    _
  $region5: #{transformer_encoder.9} parent=0 // pred_fallthru
    _
  // Predicated region
  $region6: #{transformer_encoder.9} parent=0 // pred_check
    _
  $region7: #{transformer_encoder.9} parent=0 // pred_check_branch
    %12 = sbr.rel (0) target = $region9
  $region8: #{transformer_encoder.9} parent=0 // pred_region
    _
  $region9: #{transformer_encoder.9} parent=0 // pred_fallthru
    _
  // Predicated region
  $region10: #{transformer_encoder.9} parent=0 // pred_check
    _
  $region11: #{transformer_encoder.9} parent=0 // pred_check_branch
    %14 = sbr.rel (0) target = $region13
  $region12: #{transformer_encoder.9} parent=0 // pred_region
    _
  $region13: #{transformer_encoder.9} parent=0 // pred_fallthru
    _
  // Predicated region
  $region14: #{transformer_encoder.9} parent=0 // pred_check
    _
  $region15: #{transformer_encoder.9} parent=0 // pred_check_branch
    %16 = sbr.rel (0) target = $region17
  $region16: #{transformer_encoder.9} parent=0 // pred_region
    _
  $region17: #{transformer_encoder.9} parent=0 // pred_fallthru
    _
  %v18 = vld [vmem:[%s0] sm:$0xff]
  %v19 = vld [vmem:[%s0 + $0x8] sm:$0xff]
  %v20 = vmul.f32 %v18, %v18
  %v21 = vmul.f32 %v19, %v19
  %vm22 = vcmask 261120
  %v23 = vsel %vm22, %v20, 0.0
  %24 = vadd.xlane.f32.xlu0 %v23
  %v25 = vpop.xlane.xlu0 %24
  %v26 = vsel %vm22, %v21, 0.0
  %27 = vadd.xlane.f32.xlu0 %v26
  %v28 = vpop.xlane.xlu0 %27
  %v29 = vrcp.pop 32.0
  %v30 = vmul.f32 32.0, %v29
  %v31 = vsub.f32 1.0, %v30
  %v32 = vmul.f32 %v29, %v31
  %v33 = vadd.f32 %v29, %v32
  %vm34 = vweird.f32 %v29
  %v35 = vsel %vm34, %v29, %v33
  %v36 = vmul.f32 %v25, %v35
  %v37 = vmul.f32 %v28, %v35
  %v38 = vadd.f32 %v36, 1e-06
  %v39 = vadd.f32 %v37, 1e-06
  %v40 = vrsqrt.pop %v38
  %v41 = vmul.f32 %v40, %v38
  %v42 = vmul.f32 %v41, %v40
  %v43 = vmul.f32 0.5, %v42
  %v44 = vsub.f32 1.5, %v43
  %v45 = vmul.f32 %v40, %v44
  %vm46 = vweird.f32 %v38
  %vm47 = vweird.f32 %v40
  %vm48 = vmor %vm46, %vm47
  %v49 = vsel %vm48, %v40, %v45
  %v50 = vrsqrt.pop %v39
  %v51 = vmul.f32 %v50, %v39
  %v52 = vmul.f32 %v51, %v50
  %v53 = vmul.f32 0.5, %v52
  %v54 = vsub.f32 1.5, %v53
  %v55 = vmul.f32 %v50, %v54
  %vm56 = vweird.f32 %v39
  %vm57 = vweird.f32 %v50
  %vm58 = vmor %vm56, %vm57
  %v59 = vsel %vm58, %v50, %v55
  %v60 = vmul.f32 %v18, %v49
  %v61 = vmul.f32 %v19, %v59
  %v62 = vld [vmem:[%s1] sm:$0x1]
  %v64 = vperm.slane %v62, 0
  %v66 = vmul.f32 %v60, %v64
  %v67 = vmul.f32 %v61, %v64
  %v68 = vpack.c.bf16 %v67, %v66
  %v69 = vld [vmem:[%s2] sm:$0xf]
  %v70 = vld [vmem:[%s2 + $0x4] sm:$0xf]
  %v71 = vld [vmem:[%s2 + $0x8] sm:$0xf]
  %v72 = vld [vmem:[%s2 + $0xc] sm:$0xf]
  %v73 = vld [vmem:[%s3] sm:$0x1]
  %v75 = vperm.slane %v73, 0
  %v81 = vunpack.c.l.b16 %v69
  %v82 = vunpack.c.l.b16 %v70
  %v83 = vunpack.c.l.b16 %v71
  %v84 = vunpack.c.l.b16 %v72
  %v85 = vpack.c.b16 %v82, %v81
  %v86 = vpack.c.b16 %v84, %v83
  %v90 = vsel %vm22, %v68, 0
  %92 = vmatpush.bf16.msra.mxu0 0
  %93 = vmatpush.bf16.msra.mxu0 0
  %94 = vmatpush.bf16.msra.mxu0 0
  %95 = vmatpush.bf16.msra.mxu0 0
  %96 = vmatpush.bf16.msra.mxu0 0
  %97 = vmatpush.bf16.msra.mxu0 0
  %98 = vmatpush.bf16.msra.mxu0 %v86
  %99 = vmatpush.bf16.msra.mxu0 %v85
  %100 = vmatmul.bf16.gmra.mxu0 %v90
  %v101 = vpop.f32.mrf.mxu0
  %v102 = vadd.f32 %v75, %v101
  %v103 = vpop.f32.mrf.mxu0
  %v104 = vadd.f32 %v75, %v103
  %105 = vdwg.mxu0
  %vm106 = vcmask 785408
  %107 = vst.msk [vmem:[%s4] sm:$0xff] %vm106, %v102
  %108 = vst.msk [vmem:[%s4 + $0x8] sm:$0xff] %vm106, %v104
  // Predicated region
  $region18: #{transformer_encoder.9} parent=0 // pred_check
    _
  $region19: #{transformer_encoder.9} parent=0 // pred_check_branch
    %110 = sbr.rel (0) target = $region21
  $region20: #{transformer_encoder.9} parent=0 // pred_region
    _
  $region21: #{transformer_encoder.9} parent=0 // pred_fallthru
    _
  // Predicated region
  $region22: #{transformer_encoder.9} parent=0 // pred_check
    _
  $region23: #{transformer_encoder.9} parent=0 // pred_check_branch
    %112 = sbr.rel (0) target = $region25
  $region24: #{transformer_encoder.9} parent=0 // pred_region
    _
  $region25: #{transformer_encoder.9} parent=0 // pred_fallthru
    _

// kernel: transformer_encoder.11
$region0: #{transformer_encoder.11}
  #allocation0 [shape = 'u32[]', space=smem, size = 0x4, offset = 0x4, fixed_abs, tag = 'smem constant byte address 0x4 - core index']
  #allocation1 [shape = 'u32[72,128]{1,0:T(1,128)}', space=vmem, size = 0x9000, scoped, tag = 'internal scratch']
  %s0 = inlined_call_operand.vmem [shape: f32[16,32], index: 0, kind: input, shape index: {}]
  %s1 = inlined_call_operand.vmem [shape: bf16[32,32], index: 1, kind: input, shape index: {}]
  %s2 = inlined_call_operand.vmem [shape: f32[1,32], index: 2, kind: input, shape index: {}]
  %s3 = inlined_call_operand.vmem [shape: f32[1,32], index: 3, kind: input, shape index: {}]
  %s4 = inlined_call_operand.vmem [shape: f32[16,32], index: 4, kind: input, shape index: {}, may-alias: {4,5}]
  %s5 = inlined_call_operand.vmem [shape: f32[16,32], index: 5, kind: output, shape index: {}, may-alias: {4,5}]
  %s6 = sld [smem:[#allocation0]]
  $region30: #{transformer_encoder.11} parent=0
    _
  %s8 = ssub.s32 1, %s6
  %s9 = scalar_select 0, %s8, %s6
  // Predicated region
  $region2: #{transformer_encoder.11} parent=0 // pred_check
    _
  $region3: #{transformer_encoder.11} parent=0 // pred_check_branch
    %11 = sbr.rel (0) target = $region5
  $region4: #{transformer_encoder.11} parent=0 // pred_region
    _
  $region5: #{transformer_encoder.11} parent=0 // pred_fallthru
    _
  // Predicated region
  $region6: #{transformer_encoder.11} parent=0 // pred_check
    _
  $region7: #{transformer_encoder.11} parent=0 // pred_check_branch
    %13 = sbr.rel (0) target = $region9
  $region8: #{transformer_encoder.11} parent=0 // pred_region
    _
  $region9: #{transformer_encoder.11} parent=0 // pred_fallthru
    _
  // Predicated region
  $region10: #{transformer_encoder.11} parent=0 // pred_check
    _
  $region11: #{transformer_encoder.11} parent=0 // pred_check_branch
    %15 = sbr.rel (0) target = $region13
  $region12: #{transformer_encoder.11} parent=0 // pred_region
    _
  $region13: #{transformer_encoder.11} parent=0 // pred_fallthru
    _
  // Predicated region
  $region14: #{transformer_encoder.11} parent=0 // pred_check
    _
  $region15: #{transformer_encoder.11} parent=0 // pred_check_branch
    %17 = sbr.rel (0) target = $region17
  $region16: #{transformer_encoder.11} parent=0 // pred_region
    _
  $region17: #{transformer_encoder.11} parent=0 // pred_fallthru
    _
  // Predicated region
  $region18: #{transformer_encoder.11} parent=0 // pred_check
    _
  $region19: #{transformer_encoder.11} parent=0 // pred_check_branch
    %19 = sbr.rel (0) target = $region21
  $region20: #{transformer_encoder.11} parent=0 // pred_region
    _
  $region21: #{transformer_encoder.11} parent=0 // pred_fallthru
    _
  %v21 = vld [vmem:[%s0] sm:$0xff]
  %v22 = vld [vmem:[%s0 + $0x8] sm:$0xff]
  %v23 = vpack.c.bf16 %v22, %v21
  %v24 = vld [vmem:[%s1] sm:$0xf]
  %v25 = vld [vmem:[%s1 + $0x4] sm:$0xf]
  %v26 = vld [vmem:[%s1 + $0x8] sm:$0xf]
  %v27 = vld [vmem:[%s1 + $0xc] sm:$0xf]
  %v28 = vld [vmem:[%s2] sm:$0x1]
  %v30 = vperm.slane %v28, 0
  %v36 = vunpack.c.l.b16 %v24
  %v37 = vunpack.c.l.b16 %v25
  %v38 = vunpack.c.l.b16 %v26
  %v39 = vunpack.c.l.b16 %v27
  %v40 = vpack.c.b16 %v37, %v36
  %v41 = vpack.c.b16 %v39, %v38
  %vm44 = vcmask 261120
  %v46 = vsel %vm44, %v23, 0
  %48 = vmatpush.bf16.msra.mxu0 0
  %49 = vmatpush.bf16.msra.mxu0 0
  %50 = vmatpush.bf16.msra.mxu0 0
  %51 = vmatpush.bf16.msra.mxu0 0
  %52 = vmatpush.bf16.msra.mxu0 0
  %53 = vmatpush.bf16.msra.mxu0 0
  %54 = vmatpush.bf16.msra.mxu0 %v41
  %55 = vmatpush.bf16.msra.mxu0 %v40
  %56 = vmatmul.bf16.gmra.mxu0 %v46
  %v57 = vpop.f32.mrf.mxu0
  %v58 = vadd.f32 %v30, %v57
  %v59 = vpop.f32.mrf.mxu0
  %v60 = vadd.f32 %v30, %v59
  %61 = vdwg.mxu0
  %v62 = vld [vmem:[%s4] sm:$0xff]
  %v63 = vld [vmem:[%s4 + $0x8] sm:$0xff]
  %v64 = vld [vmem:[%s3] sm:$0x1]
  %v66 = vperm.slane %v64, 0
  %v68 = vmul.f32 %v66, %v58
  %v69 = vmul.f32 %v66, %v60
  %v70 = vadd.f32 %v62, %v68
  %v71 = vadd.f32 %v63, %v69
  %72 = vst.msk [vmem:[%s5] sm:$0xff] %vm44, %v70
  %73 = vst.msk [vmem:[%s5 + $0x8] sm:$0xff] %vm44, %v71
  // Predicated region
  $region22: #{transformer_encoder.11} parent=0 // pred_check
    _
  $region23: #{transformer_encoder.11} parent=0 // pred_check_branch
    %75 = sbr.rel (0) target = $region25
  $region24: #{transformer_encoder.11} parent=0 // pred_region
    _
  $region25: #{transformer_encoder.11} parent=0 // pred_fallthru
    _
  // Predicated region
  $region26: #{transformer_encoder.11} parent=0 // pred_check
    _
  $region27: #{transformer_encoder.11} parent=0 // pred_check_branch
    %77 = sbr.rel (0) target = $region29
  $region28: #{transformer_encoder.11} parent=0 // pred_region
    _
  $region29: #{transformer_encoder.11} parent=0 // pred_fallthru
    _

// kernel: transformer_encoder.10
$region0: #{transformer_encoder.10}
  #allocation0 [shape = 'u32[]', space=smem, size = 0x4, offset = 0x4, fixed_abs, tag = 'smem constant byte address 0x4 - core index']
  #allocation1 [shape = 'u32[72,128]{1,0:T(1,128)}', space=vmem, size = 0x9000, scoped, tag = 'internal scratch']
  %s0 = inlined_call_operand.vmem [shape: f32[8,8,8], index: 0, kind: input, shape index: {}]
  %s1 = inlined_call_operand.vmem [shape: f32[8,8,8], index: 1, kind: input, shape index: {}]
  %s2 = inlined_call_operand.vmem [shape: f32[8,8,8], index: 2, kind: input, shape index: {}]
  %s3 = inlined_call_operand.vmem [shape: f32[1,8,8], index: 3, kind: input, shape index: {}]
  %s4 = inlined_call_operand.vmem [shape: f32[1,8,8], index: 4, kind: input, shape index: {}]
  %s5 = inlined_call_operand.vmem [shape: f32[8,8,8], index: 5, kind: output, shape index: {}]
  %s6 = sld [smem:[#allocation0]]
  $region53: #{transformer_encoder.10} parent=0
    _
  %s8 = ssub.s32 1, %s6
  %s9 = scalar_select 0, %s8, %s6
  loop: start=0, step=1, limit=4
  $region2: #{transformer_encoder.10} parent=0 // loop_pre_header
    _
  $region3: #{transformer_encoder.10} parent=0 // loop_header
    %s11 = sphi 0, %s15
    %p12 = scmp.ge.s32.totalorder %s11, 4
    %s21 = sphi 0, %s23
    %s24 = sphi 0, %s21
    %s25 = sphi 0, %s24
    %s41 = sphi 0, %s25
    %s47 = sphi 0, %s49
    %s50 = sphi 0, %s47
    %s51 = sphi 0, %s50
    %s67 = sphi 0, %s51
    %s73 = sphi 0, %s75
    %s76 = sphi 0, %s73
    %s77 = sphi 0, %s76
    %s93 = sphi 0, %s77
    %s97 = sphi 0, %s97
    %s99 = sphi 0, %s97
    %s100 = sphi 0, %s99
    %s114 = sphi 0, %s100
    %s118 = sphi 0, %s118
    %s120 = sphi 0, %s118
    %s121 = sphi 0, %s120
    %s135 = sphi 0, %s121
    %s141 = sphi 0, %s143
    %s144 = sphi 0, %s141
    %s145 = sphi 0, %s144
    %s161 = sphi 0, %s145
  $region4: #{transformer_encoder.10} parent=0 // loop_header_branch
    %14 = sbr.rel (%p12) target = $region8
  $region5: #{transformer_encoder.10} parent=0 // loop_body
    %s16 = ssub.s32 %s11, 1
    %s17 = ssub.s32 %s11, 2
    %s18 = sadd.s32 %s11, 1
    %s19 = ssub.s32 %s11, %s18
    %p20 = scmp.eq.s32.totalorder %s19, 0
    %s22 = sadd.s32 %s21, 1
    %s23 = scalar_select %p20, %s21, %s22
    %p26 = pneg %p20
    %p27 = scmp.eq.s32.totalorder %s11, 1
    %p28 = por %p26, %p27
    %p29 = scmp.ne.s32.totalorder %s21, %s24
    %p30 = scmp.eq.s32.totalorder %s11, 0
    %p31 = por %p29, %p30
    %p32 = scmp.ne.s32.totalorder %s21, %s24
    %p33 = scmp.eq.s32.totalorder %s16, 1
    %p34 = por %p32, %p33
    %p35 = scmp.ne.s32.totalorder %s24, %s25
    %p36 = scmp.eq.s32.totalorder %s16, 0
    %p37 = por %p35, %p36
    %p38 = scmp.ne.s32.totalorder %s24, %s25
    %p39 = scmp.eq.s32.totalorder %s17, 1
    %p40 = por %p38, %p39
    %p42 = scmp.ne.s32.totalorder %s25, %s41
    %p43 = scmp.eq.s32.totalorder %s17, 0
    %p44 = por %p42, %p43
    %s45 = ssub.s32 %s11, %s18
    %p46 = scmp.eq.s32.totalorder %s45, 0
    %s48 = sadd.s32 %s47, 1
    %s49 = scalar_select %p46, %s47, %s48
    %p52 = pneg %p46
    %p53 = scmp.eq.s32.totalorder %s11, 1
    %p54 = por %p52, %p53
    %p55 = scmp.ne.s32.totalorder %s47, %s50
    %p56 = scmp.eq.s32.totalorder %s11, 0
    %p57 = por %p55, %p56
    %p58 = scmp.ne.s32.totalorder %s47, %s50
    %p59 = scmp.eq.s32.totalorder %s16, 1
    %p60 = por %p58, %p59
    %p61 = scmp.ne.s32.totalorder %s50, %s51
    %p62 = scmp.eq.s32.totalorder %s16, 0
    %p63 = por %p61, %p62
    %p64 = scmp.ne.s32.totalorder %s50, %s51
    %p65 = scmp.eq.s32.totalorder %s17, 1
    %p66 = por %p64, %p65
    %p68 = scmp.ne.s32.totalorder %s51, %s67
    %p69 = scmp.eq.s32.totalorder %s17, 0
    %p70 = por %p68, %p69
    %s71 = ssub.s32 %s11, %s18
    %p72 = scmp.eq.s32.totalorder %s71, 0
    %s74 = sadd.s32 %s73, 1
    %s75 = scalar_select %p72, %s73, %s74
    %p78 = pneg %p72
    %p79 = scmp.eq.s32.totalorder %s11, 1
    %p80 = por %p78, %p79
    %p81 = scmp.ne.s32.totalorder %s73, %s76
    %p82 = scmp.eq.s32.totalorder %s11, 0
    %p83 = por %p81, %p82
    %p84 = scmp.ne.s32.totalorder %s73, %s76
    %p85 = scmp.eq.s32.totalorder %s16, 1
    %p86 = por %p84, %p85
    %p87 = scmp.ne.s32.totalorder %s76, %s77
    %p88 = scmp.eq.s32.totalorder %s16, 0
    %p89 = por %p87, %p88
    %p90 = scmp.ne.s32.totalorder %s76, %s77
    %p91 = scmp.eq.s32.totalorder %s17, 1
    %p92 = por %p90, %p91
    %p94 = scmp.ne.s32.totalorder %s77, %s93
    %p95 = scmp.eq.s32.totalorder %s17, 0
    %p96 = por %p94, %p95
    %s98 = sadd.s32 %s97, 1
    %p101 = scmp.eq.s32.totalorder %s11, 1
    %p102 = scmp.ne.s32.totalorder %s97, %s99
    %p103 = scmp.eq.s32.totalorder %s11, 0
    %p104 = por %p102, %p103
    %p105 = scmp.ne.s32.totalorder %s97, %s99
    %p106 = scmp.eq.s32.totalorder %s16, 1
    %p107 = por %p105, %p106
    %p108 = scmp.ne.s32.totalorder %s99, %s100
    %p109 = scmp.eq.s32.totalorder %s16, 0
    %p110 = por %p108, %p109
    %p111 = scmp.ne.s32.totalorder %s99, %s100
    %p112 = scmp.eq.s32.totalorder %s17, 1
    %p113 = por %p111, %p112
    %p115 = scmp.ne.s32.totalorder %s100, %s114
    %p116 = scmp.eq.s32.totalorder %s17, 0
    %p117 = por %p115, %p116
    %s119 = sadd.s32 %s118, 1
    %p122 = scmp.eq.s32.totalorder %s11, 1
    %p123 = scmp.ne.s32.totalorder %s118, %s120
    %p124 = scmp.eq.s32.totalorder %s11, 0
    %p125 = por %p123, %p124
    %p126 = scmp.ne.s32.totalorder %s118, %s120
    %p127 = scmp.eq.s32.totalorder %s16, 1
    %p128 = por %p126, %p127
    %p129 = scmp.ne.s32.totalorder %s120, %s121
    %p130 = scmp.eq.s32.totalorder %s16, 0
    %p131 = por %p129, %p130
    %p132 = scmp.ne.s32.totalorder %s120, %s121
    %p133 = scmp.eq.s32.totalorder %s17, 1
    %p134 = por %p132, %p133
    %p136 = scmp.ne.s32.totalorder %s121, %s135
    %p137 = scmp.eq.s32.totalorder %s17, 0
    %p138 = por %p136, %p137
    %s139 = ssub.s32 %s11, %s18
    %p140 = scmp.eq.s32.totalorder %s139, 0
    %s142 = sadd.s32 %s141, 1
    %s143 = scalar_select %p140, %s141, %s142
    %p146 = pneg %p140
    %p147 = scmp.eq.s32.totalorder %s11, 1
    %p148 = por %p146, %p147
    %p149 = scmp.ne.s32.totalorder %s141, %s144
    %p150 = scmp.eq.s32.totalorder %s11, 0
    %p151 = por %p149, %p150
    %p152 = scmp.ne.s32.totalorder %s141, %s144
    %p153 = scmp.eq.s32.totalorder %s16, 1
    %p154 = por %p152, %p153
    %p155 = scmp.ne.s32.totalorder %s144, %s145
    %p156 = scmp.eq.s32.totalorder %s16, 0
    %p157 = por %p155, %p156
    %p158 = scmp.ne.s32.totalorder %s144, %s145
    %p159 = scmp.eq.s32.totalorder %s17, 1
    %p160 = por %p158, %p159
    %p162 = scmp.ne.s32.totalorder %s145, %s161
    %p163 = scmp.eq.s32.totalorder %s17, 0
    %p164 = por %p162, %p163
    %p165 = scmp.le.s32.totalorder 1, %s11
    %p166 = scmp.lt.s32.totalorder %s11, 3
    %p167 = pnand %p165, %p166
    %p168 = pneg %p167
    // Predicated region
    $region9: #{transformer_encoder.10} parent=5 // pred_check
      _
    $region10: #{transformer_encoder.10} parent=5 // pred_check_branch
      %170 = sbr.rel (%p167) target = $region12
    $region11: #{transformer_encoder.10} parent=5 // pred_region
      %s171 = ssub.s32 %s11, 1
      // Predicated region
      $region13: #{transformer_encoder.10} parent=11 // pred_check
        %p172 = pneg %p110
      $region14: #{transformer_encoder.10} parent=11 // pred_check_branch
        %174 = sbr.rel (%p172) target = $region16
      $region15: #{transformer_encoder.10} parent=11 // pred_region
        _
      $region16: #{transformer_encoder.10} parent=11 // pred_fallthru
        _
      // Predicated region
      $region17: #{transformer_encoder.10} parent=11 // pred_check
        %p175 = pneg %p131
      $region18: #{transformer_encoder.10} parent=11 // pred_check_branch
        %177 = sbr.rel (%p175) target = $region20
      $region19: #{transformer_encoder.10} parent=11 // pred_region
        _
      $region20: #{transformer_encoder.10} parent=11 // pred_fallthru
        _
    $region12: #{transformer_encoder.10} parent=5 // pred_fallthru
      _
    %p178 = scmp.lt.s32.totalorder %s11, 2
    // Predicated region
    $region21: #{transformer_encoder.10} parent=5 // pred_check
      %p179 = pneg %p178
    $region22: #{transformer_encoder.10} parent=5 // pred_check_branch
      %181 = sbr.rel (%p179) target = $region24
    $region23: #{transformer_encoder.10} parent=5 // pred_region
      // Predicated region
      $region25: #{transformer_encoder.10} parent=23 // pred_check
        %p182 = pneg %p31
      $region26: #{transformer_encoder.10} parent=23 // pred_check_branch
        %184 = sbr.rel (%p182) target = $region28
      $region27: #{transformer_encoder.10} parent=23 // pred_region
        %s185 = smul.u32 4, %s11
        %p186 = scmp.lt.s32.totalorder %s185, 7
        %s187 = scalar_select %p186, %s185, 7
        %s188 = smul.addr %s187, 8
        %s189 = scalar_lea.vmem %s0, %s188
        %s190 = smul.u32 4, %s11
      $region28: #{transformer_encoder.10} parent=23 // pred_fallthru
        _
      // Predicated region
      $region29: #{transformer_encoder.10} parent=23 // pred_check
        %p191 = pneg %p57
      $region30: #{transformer_encoder.10} parent=23 // pred_check_branch
        %193 = sbr.rel (%p191) target = $region32
      $region31: #{transformer_encoder.10} parent=23 // pred_region
        %s194 = smul.u32 4, %s11
        %p195 = scmp.lt.s32.totalorder %s194, 7
        %s196 = scalar_select %p195, %s194, 7
        %s197 = smul.addr %s196, 8
        %s198 = scalar_lea.vmem %s1, %s197
        %s199 = smul.u32 4, %s11
      $region32: #{transformer_encoder.10} parent=23 // pred_fallthru
        _
      // Predicated region
      $region33: #{transformer_encoder.10} parent=23 // pred_check
        %p200 = pneg %p83
      $region34: #{transformer_encoder.10} parent=23 // pred_check_branch
        %202 = sbr.rel (%p200) target = $region36
      $region35: #{transformer_encoder.10} parent=23 // pred_region
        %s203 = smul.u32 4, %s11
        %p204 = scmp.lt.s32.totalorder %s203, 7
        %s205 = scalar_select %p204, %s203, 7
        %s206 = smul.addr %s205, 8
        %s207 = scalar_lea.vmem %s2, %s206
        %s208 = smul.u32 4, %s11
      $region36: #{transformer_encoder.10} parent=23 // pred_fallthru
        _
    $region24: #{transformer_encoder.10} parent=5 // pred_fallthru
      _
    %p209 = scmp.le.s32.totalorder 1, %s11
    %p210 = scmp.lt.s32.totalorder %s11, 3
    %p211 = pnand %p209, %p210
    %p212 = pneg %p211
    // Predicated region
    $region37: #{transformer_encoder.10} parent=5 // pred_check
      _
    $region38: #{transformer_encoder.10} parent=5 // pred_check_branch
      %214 = sbr.rel (%p211) target = $region40
    $region39: #{transformer_encoder.10} parent=5 // pred_region
      %s215 = ssub.s32 %s11, 1
      %s216 = smul.u32 4, %s16
      %p217 = scmp.lt.s32.totalorder %s216, 7
      %s218 = scalar_select %p217, %s216, 7
      %s219 = smul.addr %s218, 8
      %s220 = scalar_lea.vmem %s0, %s219
      %p221 = pneg %p37
      %p222 = pneg %p34
      %s223 = smul.u32 4, %s16
      %p224 = scmp.lt.s32.totalorder %s223, 7
      %s225 = scalar_select %p224, %s223, 7
      %s226 = smul.addr %s225, 8
      %s227 = scalar_lea.vmem %s1, %s226
      %p228 = pneg %p63
      %p229 = pneg %p60
      %s230 = smul.u32 4, %s16
      %p231 = scmp.lt.s32.totalorder %s230, 7
      %s232 = scalar_select %p231, %s230, 7
      %s233 = smul.addr %s232, 8
      %s234 = scalar_lea.vmem %s2, %s233
      %p235 = pneg %p89
      %p236 = pneg %p86
      %p237 = pneg %p110
      %p238 = pneg %p107
      %p239 = pneg %p131
      %p240 = pneg %p128
      %p241 = pneg %p157
      %p242 = pneg %p154
      %s243 = smul.u32 4, %s16
      %p244 = scmp.lt.s32.totalorder %s243, 7
      %s245 = scalar_select %p244, %s243, 7
      %s246 = smul.addr %s245, 8
      %s247 = scalar_lea.vmem %s5, %s246
      %s248 = smul.u32 4, %s16
      %p249 = scmp.lt.s32.totalorder %s248, 7
      %s250 = scalar_select %p249, %s248, 7
      %s251 = smul.addr %s250, 8
      %s252 = scalar_lea.vmem %s0, %s251
      %s253 = smul.u32 4, %s16
      %s254 = smul.u32 4, %s16
      %p255 = scmp.lt.s32.totalorder %s254, 7
      %s256 = scalar_select %p255, %s254, 7
      %s257 = smul.addr %s256, 8
      %s258 = scalar_lea.vmem %s1, %s257
      %s259 = smul.u32 4, %s16
      %s260 = smul.u32 4, %s16
      %p261 = scmp.lt.s32.totalorder %s260, 7
      %s262 = scalar_select %p261, %s260, 7
      %s263 = smul.addr %s262, 8
      %s264 = scalar_lea.vmem %s2, %s263
      %s265 = smul.u32 4, %s16
      %s266 = smul.u32 4, %s16
      %p267 = scmp.lt.s32.totalorder %s266, 7
      %s268 = scalar_select %p267, %s266, 7
      %s269 = smul.addr %s268, 8
      %s270 = scalar_lea.vmem %s5, %s269
      %s271 = smul.u32 4, %s16
      %v273 = vld [vmem:[%s252] sm:$0xff]
      %v274 = vld [vmem:[%s252 + $0x8] sm:$0xff]
      %v275 = vld [vmem:[%s252 + $0x10] sm:$0xff]
      %v276 = vld [vmem:[%s252 + $0x18] sm:$0xff]
      %v277 = vmul.f32 %v273, 0.35355338
      %v278 = vmul.f32 %v274, 0.35355338
      %v279 = vmul.f32 %v275, 0.35355338
      %v280 = vmul.f32 %v276, 0.35355338
      %v281 = vld [vmem:[%s258] sm:$0xff]
      %v282 = vld [vmem:[%s258 + $0x8] sm:$0xff]
      %v283 = vld [vmem:[%s258 + $0x10] sm:$0xff]
      %v284 = vld [vmem:[%s258 + $0x18] sm:$0xff]
      %v285 = vld [vmem:[%s264] sm:$0xff]
      %v286 = vld [vmem:[%s264 + $0x8] sm:$0xff]
      %v287 = vld [vmem:[%s264 + $0x10] sm:$0xff]
      %v288 = vld [vmem:[%s264 + $0x18] sm:$0xff]
      %v289 = vpack.c.bf16 %v285, %v285
      %v290 = vpack.c.bf16 %v286, %v286
      %v291 = vpack.c.bf16 %v287, %v287
      %v292 = vpack.c.bf16 %v288, %v288
      %v293 = vld [vmem:[%s3] sm:$0xff]
      %v294 = vld [vmem:[%s4] sm:$0xff]
      %v295 = vmul.f32 %v277, %v293
      %v296 = vmul.f32 %v278, %v293
      %v297 = vmul.f32 %v279, %v293
      %v298 = vmul.f32 %v280, %v293
      %v299 = vsub.f32 0.0, %v277
      %v300 = vsub.f32 0.0, %v278
      %v301 = vsub.f32 0.0, %v279
      %v302 = vsub.f32 0.0, %v280
      %307 = vrot.lane.b32.xlu0 %v299, 124
      %v308 = vpop.permute.xlu0 %307
      %309 = vrot.lane.b32.xlu0 %v300, 124
      %v310 = vpop.permute.xlu0 %309
      %311 = vrot.lane.b32.xlu0 %v301, 124
      %v312 = vpop.permute.xlu0 %311
      %313 = vrot.lane.b32.xlu0 %v302, 124
      %v314 = vpop.permute.xlu0 %313
      %323 = vrot.lane.b32.xlu0 %v277, 4
      %v324 = vpop.permute.xlu0 %323
      %325 = vrot.lane.b32.xlu0 %v278, 4
      %v326 = vpop.permute.xlu0 %325
      %327 = vrot.lane.b32.xlu0 %v279, 4
      %v328 = vpop.permute.xlu0 %327
      %329 = vrot.lane.b32.xlu0 %v280, 4
      %v330 = vpop.permute.xlu0 %329
      %vm335 = vcmask 31744
      %v336 = vsel %vm335, %v308, %v324
      %v337 = vsel %vm335, %v310, %v326
      %v338 = vsel %vm335, %v312, %v328
      %v339 = vsel %vm335, %v314, %v330
      %v340 = vmul.f32 %v336, %v294
      %v341 = vmul.f32 %v337, %v294
      %v342 = vmul.f32 %v338, %v294
      %v343 = vmul.f32 %v339, %v294
      %v344 = vadd.f32 %v295, %v340
      %v345 = vadd.f32 %v296, %v341
      %v346 = vadd.f32 %v297, %v342
      %v347 = vadd.f32 %v298, %v343
      %v348 = vmul.f32 %v281, %v293
      %v349 = vmul.f32 %v282, %v293
      %v350 = vmul.f32 %v283, %v293
      %v351 = vmul.f32 %v284, %v293
      %v352 = vsub.f32 0.0, %v281
      %v353 = vsub.f32 0.0, %v282
      %v354 = vsub.f32 0.0, %v283
      %v355 = vsub.f32 0.0, %v284
      %360 = vrot.lane.b32.xlu0 %v352, 124
      %v361 = vpop.permute.xlu0 %360
      %362 = vrot.lane.b32.xlu0 %v353, 124
      %v363 = vpop.permute.xlu0 %362
      %364 = vrot.lane.b32.xlu0 %v354, 124
      %v365 = vpop.permute.xlu0 %364
      %366 = vrot.lane.b32.xlu0 %v355, 124
      %v367 = vpop.permute.xlu0 %366
      %376 = vrot.lane.b32.xlu0 %v281, 4
      %v377 = vpop.permute.xlu0 %376
      %378 = vrot.lane.b32.xlu0 %v282, 4
      %v379 = vpop.permute.xlu0 %378
      %380 = vrot.lane.b32.xlu0 %v283, 4
      %v381 = vpop.permute.xlu0 %380
      %382 = vrot.lane.b32.xlu0 %v284, 4
      %v383 = vpop.permute.xlu0 %382
      %v388 = vsel %vm335, %v361, %v377
      %v389 = vsel %vm335, %v363, %v379
      %v390 = vsel %vm335, %v365, %v381
      %v391 = vsel %vm335, %v367, %v383
      %v392 = vmul.f32 %v388, %v294
      %v393 = vmul.f32 %v389, %v294
      %v394 = vmul.f32 %v390, %v294
      %v395 = vmul.f32 %v391, %v294
      %v396 = vadd.f32 %v348, %v392
      %v397 = vadd.f32 %v349, %v393
      %v398 = vadd.f32 %v350, %v394
      %v399 = vadd.f32 %v351, %v395
      %v400 = vpack.c.bf16 %v344, %v344
      %v401 = vpack.c.bf16 %v345, %v345
      %v402 = vpack.c.bf16 %v346, %v346
      %v403 = vpack.c.bf16 %v347, %v347
      %v404 = vpack.c.bf16 %v396, %v396
      %v405 = vpack.c.bf16 %v397, %v397
      %v406 = vpack.c.bf16 %v398, %v398
      %v407 = vpack.c.bf16 %v399, %v399
      %vm408 = vcmask 64512
      %v410 = vsel %vm408, %v400, 0
      %v413 = vsel %vm408, %v404, 0
      %415 = vmatpush.bf16.xpose.msra.mxu0 0
      %416 = vmatpush.bf16.xpose.msra.mxu0 0
      %417 = vmatpush.bf16.xpose.msra.mxu0 0
      %418 = vmatpush.bf16.xpose.msra.mxu0 0
      %419 = vmatpush.bf16.xpose.msra.mxu0 0
      %420 = vmatpush.bf16.xpose.msra.mxu0 0
      %421 = vmatpush.bf16.xpose.msra.mxu0 0
      %422 = vmatpush.bf16.xpose.msra.mxu0 %v413
      %423 = vmatmul.bf16.gmra.mxu0 %v410
      %v424 = vpop.f32.mrf.mxu0
      %v425 = vadd.f32 0.0, %v424
      %v426 = vpop.f32.mrf.mxu0
      %427 = vdwg.mxu0
      %v429 = vsel %vm408, %v401, 0
      %v432 = vsel %vm408, %v405, 0
      %434 = vmatpush.bf16.xpose.msra.mxu0 0
      %435 = vmatpush.bf16.xpose.msra.mxu0 0
      %436 = vmatpush.bf16.xpose.msra.mxu0 0
      %437 = vmatpush.bf16.xpose.msra.mxu0 0
      %438 = vmatpush.bf16.xpose.msra.mxu0 0
      %439 = vmatpush.bf16.xpose.msra.mxu0 0
      %440 = vmatpush.bf16.xpose.msra.mxu0 0
      %441 = vmatpush.bf16.xpose.msra.mxu0 %v432
      %442 = vmatmul.bf16.gmra.mxu0 %v429
      %v443 = vpop.f32.mrf.mxu0
      %v444 = vadd.f32 0.0, %v443
      %v445 = vpop.f32.mrf.mxu0
      %446 = vdwg.mxu0
      %v448 = vsel %vm408, %v402, 0
      %v451 = vsel %vm408, %v406, 0
      %453 = vmatpush.bf16.xpose.msra.mxu0 0
      %454 = vmatpush.bf16.xpose.msra.mxu0 0
      %455 = vmatpush.bf16.xpose.msra.mxu0 0
      %456 = vmatpush.bf16.xpose.msra.mxu0 0
      %457 = vmatpush.bf16.xpose.msra.mxu0 0
      %458 = vmatpush.bf16.xpose.msra.mxu0 0
      %459 = vmatpush.bf16.xpose.msra.mxu0 0
      %460 = vmatpush.bf16.xpose.msra.mxu0 %v451
      %461 = vmatmul.bf16.gmra.mxu0 %v448
      %v462 = vpop.f32.mrf.mxu0
      %v463 = vadd.f32 0.0, %v462
      %v464 = vpop.f32.mrf.mxu0
      %465 = vdwg.mxu0
      %v467 = vsel %vm408, %v403, 0
      %v470 = vsel %vm408, %v407, 0
      %472 = vmatpush.bf16.xpose.msra.mxu0 0
      %473 = vmatpush.bf16.xpose.msra.mxu0 0
      %474 = vmatpush.bf16.xpose.msra.mxu0 0
      %475 = vmatpush.bf16.xpose.msra.mxu0 0
      %476 = vmatpush.bf16.xpose.msra.mxu0 0
      %477 = vmatpush.bf16.xpose.msra.mxu0 0
      %478 = vmatpush.bf16.xpose.msra.mxu0 0
      %479 = vmatpush.bf16.xpose.msra.mxu0 %v470
      %480 = vmatmul.bf16.gmra.mxu0 %v467
      %v481 = vpop.f32.mrf.mxu0
      %v482 = vadd.f32 0.0, %v481
      %v483 = vpop.f32.mrf.mxu0
      %484 = vdwg.mxu0
      %v485 = vsel %vm408, %v425, -inf
      %486 = vmax.xlane.f32.xlu0 %v485
      %v487 = vpop.xlane.xlu0 %486
      %v488 = vsel %vm408, %v444, -inf
      %489 = vmax.xlane.f32.xlu0 %v488
      %v490 = vpop.xlane.xlu0 %489
      %v491 = vsel %vm408, %v463, -inf
      %492 = vmax.xlane.f32.xlu0 %v491
      %v493 = vpop.xlane.xlu0 %492
      %v494 = vsel %vm408, %v482, -inf
      %495 = vmax.xlane.f32.xlu0 %v494
      %v496 = vpop.xlane.xlu0 %495
      %v497 = vsub.f32 %v425, %v487
      %v498 = vsub.f32 %v444, %v490
      %v499 = vsub.f32 %v463, %v493
      %v500 = vsub.f32 %v482, %v496
      %v501 = vmul.f32 %v497, 1.442695
      %v502 = vpow.pop %v501
      %v503 = vmul.f32 %v498, 1.442695
      %v504 = vpow.pop %v503
      %v505 = vmul.f32 %v499, 1.442695
      %v506 = vpow.pop %v505
      %v507 = vmul.f32 %v500, 1.442695
      %v508 = vpow.pop %v507
      %v509 = vsel %vm408, %v502, 0.0
      %510 = vadd.xlane.f32.xlu0 %v509
      %v511 = vpop.xlane.xlu0 %510
      %v512 = vsel %vm408, %v504, 0.0
      %513 = vadd.xlane.f32.xlu0 %v512
      %v514 = vpop.xlane.xlu0 %513
      %v515 = vsel %vm408, %v506, 0.0
      %516 = vadd.xlane.f32.xlu0 %v515
      %v517 = vpop.xlane.xlu0 %516
      %v518 = vsel %vm408, %v508, 0.0
      %519 = vadd.xlane.f32.xlu0 %v518
      %v520 = vpop.xlane.xlu0 %519
      %v521 = vrcp.pop %v511
      %v522 = vrcp.pop %v514
      %v523 = vrcp.pop %v517
      %v524 = vrcp.pop %v520
      %v525 = vmul.f32 %v502, %v521
      %v526 = vmul.f32 %v504, %v522
      %v527 = vmul.f32 %v506, %v523
      %v528 = vmul.f32 %v508, %v524
      %v529 = vpack.c.bf16 %v525, %v525
      %v530 = vpack.c.bf16 %v526, %v526
      %v531 = vpack.c.bf16 %v527, %v527
      %v532 = vpack.c.bf16 %v528, %v528
      %v534 = vsel %vm408, %v529, 0
      %vm536 = vcmask 1043456
      %v538 = vsel %vm536, %v289, 0
      %540 = vmatpush.bf16.msra.mxu0 0
      %541 = vmatpush.bf16.msra.mxu0 0
      %542 = vmatpush.bf16.msra.mxu0 0
      %543 = vmatpush.bf16.msra.mxu0 0
      %544 = vmatpush.bf16.msra.mxu0 0
      %545 = vmatpush.bf16.msra.mxu0 0
      %546 = vmatpush.bf16.msra.mxu0 0
      %547 = vmatpush.bf16.msra.mxu0 %v538
      %548 = vmatmul.bf16.gmra.mxu0 %v534
      %v549 = vpop.f32.mrf.mxu0
      %v550 = vadd.f32 0.0, %v549
      %v551 = vpop.f32.mrf.mxu0
      %552 = vdwg.mxu0
      %v554 = vsel %vm408, %v530, 0
      %v557 = vsel %vm536, %v290, 0
      %559 = vmatpush.bf16.msra.mxu0 0
      %560 = vmatpush.bf16.msra.mxu0 0
      %561 = vmatpush.bf16.msra.mxu0 0
      %562 = vmatpush.bf16.msra.mxu0 0
      %563 = vmatpush.bf16.msra.mxu0 0
      %564 = vmatpush.bf16.msra.mxu0 0
      %565 = vmatpush.bf16.msra.mxu0 0
      %566 = vmatpush.bf16.msra.mxu0 %v557
      %567 = vmatmul.bf16.gmra.mxu0 %v554
      %v568 = vpop.f32.mrf.mxu0
      %v569 = vadd.f32 0.0, %v568
      %v570 = vpop.f32.mrf.mxu0
      %571 = vdwg.mxu0
      %v573 = vsel %vm408, %v531, 0
      %v576 = vsel %vm536, %v291, 0
      %578 = vmatpush.bf16.msra.mxu0 0
      %579 = vmatpush.bf16.msra.mxu0 0
      %580 = vmatpush.bf16.msra.mxu0 0
      %581 = vmatpush.bf16.msra.mxu0 0
      %582 = vmatpush.bf16.msra.mxu0 0
      %583 = vmatpush.bf16.msra.mxu0 0
      %584 = vmatpush.bf16.msra.mxu0 0
      %585 = vmatpush.bf16.msra.mxu0 %v576
      %586 = vmatmul.bf16.gmra.mxu0 %v573
      %v587 = vpop.f32.mrf.mxu0
      %v588 = vadd.f32 0.0, %v587
      %v589 = vpop.f32.mrf.mxu0
      %590 = vdwg.mxu0
      %v592 = vsel %vm408, %v532, 0
      %v595 = vsel %vm536, %v292, 0
      %597 = vmatpush.bf16.msra.mxu0 0
      %598 = vmatpush.bf16.msra.mxu0 0
      %599 = vmatpush.bf16.msra.mxu0 0
      %600 = vmatpush.bf16.msra.mxu0 0
      %601 = vmatpush.bf16.msra.mxu0 0
      %602 = vmatpush.bf16.msra.mxu0 0
      %603 = vmatpush.bf16.msra.mxu0 0
      %604 = vmatpush.bf16.msra.mxu0 %v595
      %605 = vmatmul.bf16.gmra.mxu0 %v592
      %v606 = vpop.f32.mrf.mxu0
      %v607 = vadd.f32 0.0, %v606
      %v608 = vpop.f32.mrf.mxu0
      %609 = vdwg.mxu0
      %610 = vst.msk [vmem:[%s270] sm:$0xff] %vm408, %v550
      %611 = vst.msk [vmem:[%s270 + $0x8] sm:$0xff] %vm408, %v569
      %612 = vst.msk [vmem:[%s270 + $0x10] sm:$0xff] %vm408, %v588
      %613 = vst.msk [vmem:[%s270 + $0x18] sm:$0xff] %vm408, %v607
      %s614 = smul.u32 4, %s16
      %p615 = scmp.lt.s32.totalorder %s614, 7
      %s616 = scalar_select %p615, %s614, 7
      %s617 = smul.addr %s616, 8
      %s618 = scalar_lea.vmem %s5, %s617
      // Predicated region
      $region41: #{transformer_encoder.10} parent=39 // pred_check
        %p619 = pneg %p154
      $region42: #{transformer_encoder.10} parent=39 // pred_check_branch
        %621 = sbr.rel (%p619) target = $region44
      $region43: #{transformer_encoder.10} parent=39 // pred_region
        %s622 = smul.u32 4, %s16
      $region44: #{transformer_encoder.10} parent=39 // pred_fallthru
        _
    $region40: #{transformer_encoder.10} parent=5 // pred_fallthru
      _
    %p623 = scmp.le.s32.totalorder 2, %s11
    // Predicated region
    $region45: #{transformer_encoder.10} parent=5 // pred_check
      %p624 = pneg %p623
    $region46: #{transformer_encoder.10} parent=5 // pred_check_branch
      %626 = sbr.rel (%p624) target = $region48
    $region47: #{transformer_encoder.10} parent=5 // pred_region
      %s627 = ssub.s32 %s11, 2
      // Predicated region
      $region49: #{transformer_encoder.10} parent=47 // pred_check
        %p628 = pneg %p160
      $region50: #{transformer_encoder.10} parent=47 // pred_check_branch
        %630 = sbr.rel (%p628) target = $region52
      $region51: #{transformer_encoder.10} parent=47 // pred_region
        %s631 = smul.u32 4, %s17
        %p632 = scmp.lt.s32.totalorder %s631, 7
        %s633 = scalar_select %p632, %s631, 7
        %s634 = smul.addr %s633, 8
        %s635 = scalar_lea.vmem %s5, %s634
      $region52: #{transformer_encoder.10} parent=47 // pred_fallthru
        _
    $region48: #{transformer_encoder.10} parent=5 // pred_fallthru
      _
  $region6: #{transformer_encoder.10} parent=0 // loop_footer
    %s15 = sadd.s32 1, %s11
  $region7: #{transformer_encoder.10} parent=0 // loop_footer_branch
    %10 = sbr.rel target = $region3
  $region8: #{transformer_encoder.10} parent=0 // loop_exit
    _

// kernel: transformer_encoder.17
$region0: #{transformer_encoder.17}
  #allocation0 [shape = 'u32[]', space=smem, size = 0x4, offset = 0x4, fixed_abs, tag = 'smem constant byte address 0x4 - core index']
  #allocation1 [shape = 'u32[72,128]{1,0:T(1,128)}', space=vmem, size = 0x9000, scoped, tag = 'internal scratch']
  %s0 = inlined_call_operand.vmem [shape: f32[16,32], index: 0, kind: input, shape index: {}]
  %s1 = inlined_call_operand.vmem [shape: f32[1,32], index: 1, kind: input, shape index: {}]
  %s2 = inlined_call_operand.hbm [shape: f32[16,32], index: 2, kind: output, shape index: {}]
  %s3 = sld [smem:[#allocation0]]
  $region18: #{transformer_encoder.17} parent=0
    _
  %s5 = ssub.s32 1, %s3
  %s6 = scalar_select 0, %s5, %s3
  $region1: #{transformer_encoder.17} parent=0
    #allocation2 [shape = 'u8[8192]{0}', space=vmem, size = 0x2000, scoped, tag = 'output window, operand 0, single buffered']
    #allocation3 [shape = 's32[1]{0}', space=sflag, size = 0x4, scoped, tag = 'scoped memory for transformer_encoder.17']
    %7 = vsyncpa [#allocation3], 0
    // Predicated region
    $region2: #{transformer_encoder.17} parent=1 // pred_check
      _
    $region3: #{transformer_encoder.17} parent=1 // pred_check_branch
      %9 = sbr.rel (0) target = $region5
    $region4: #{transformer_encoder.17} parent=1 // pred_region
      _
    $region5: #{transformer_encoder.17} parent=1 // pred_fallthru
      _
    // Predicated region
    $region6: #{transformer_encoder.17} parent=1 // pred_check
      _
    $region7: #{transformer_encoder.17} parent=1 // pred_check_branch
      %11 = sbr.rel (0) target = $region9
    $region8: #{transformer_encoder.17} parent=1 // pred_region
      _
    $region9: #{transformer_encoder.17} parent=1 // pred_fallthru
      _
    %v12 = vld [vmem:[%s0] sm:$0xff]
    %v13 = vld [vmem:[%s0 + $0x8] sm:$0xff]
    %v14 = vmul.f32 %v12, %v12
    %v15 = vmul.f32 %v13, %v13
    %vm16 = vcmask 261120
    %v17 = vsel %vm16, %v14, 0.0
    %18 = vadd.xlane.f32.xlu0 %v17
    %v19 = vpop.xlane.xlu0 %18
    %v20 = vsel %vm16, %v15, 0.0
    %21 = vadd.xlane.f32.xlu0 %v20
    %v22 = vpop.xlane.xlu0 %21
    %v23 = vrcp.pop 32.0
    %v24 = vmul.f32 32.0, %v23
    %v25 = vsub.f32 1.0, %v24
    %v26 = vmul.f32 %v23, %v25
    %v27 = vadd.f32 %v23, %v26
    %vm28 = vweird.f32 %v23
    %v29 = vsel %vm28, %v23, %v27
    %v30 = vmul.f32 %v19, %v29
    %v31 = vmul.f32 %v22, %v29
    %v32 = vadd.f32 %v30, 1e-06
    %v33 = vadd.f32 %v31, 1e-06
    %v34 = vrsqrt.pop %v32
    %v35 = vmul.f32 %v34, %v32
    %v36 = vmul.f32 %v35, %v34
    %v37 = vmul.f32 0.5, %v36
    %v38 = vsub.f32 1.5, %v37
    %v39 = vmul.f32 %v34, %v38
    %vm40 = vweird.f32 %v32
    %vm41 = vweird.f32 %v34
    %vm42 = vmor %vm40, %vm41
    %v43 = vsel %vm42, %v34, %v39
    %v44 = vrsqrt.pop %v33
    %v45 = vmul.f32 %v44, %v33
    %v46 = vmul.f32 %v45, %v44
    %v47 = vmul.f32 0.5, %v46
    %v48 = vsub.f32 1.5, %v47
    %v49 = vmul.f32 %v44, %v48
    %vm50 = vweird.f32 %v33
    %vm51 = vweird.f32 %v44
    %vm52 = vmor %vm50, %vm51
    %v53 = vsel %vm52, %v44, %v49
    %v54 = vmul.f32 %v12, %v43
    %v55 = vmul.f32 %v13, %v53
    %v56 = vld [vmem:[%s1] sm:$0x1]
    %v58 = vperm.slane %v56, 0
    %v60 = vmul.f32 %v54, %v58
    %v61 = vmul.f32 %v55, %v58
    %62 = vst.msk [vmem:[#allocation2] sm:$0xff] %vm16, %v60
    %63 = vst.msk [vmem:[#allocation2 + $0x8] sm:$0xff] %vm16, %v61
    // Predicated region
    $region10: #{transformer_encoder.17} parent=1 // pred_check
      _
    $region11: #{transformer_encoder.17} parent=1 // pred_check_branch
      %65 = sbr.rel (0) target = $region13
    $region12: #{transformer_encoder.17} parent=1 // pred_region
      %67 = vsyncadd [#allocation3], 0
      %s68 = sshll.u32 [#allocation2], 4
      %s69 = int_to_ptr.vmem [resolvable:$true] %s68
      %s70 = sshll.u32 %s2, 4
      %s71 = int_to_ptr.hbm [resolvable:$true] %s70
      %76 = dma.vmem_to_hbm [thread:$0]  %s69, 256, %s71, [#allocation3], 128, 128, 8
    $region13: #{transformer_encoder.17} parent=1 // pred_fallthru
      _
    // Predicated region
    $region14: #{transformer_encoder.17} parent=1 // pred_check
      _
    $region15: #{transformer_encoder.17} parent=1 // pred_check_branch
      %78 = sbr.rel (0) target = $region17
    $region16: #{transformer_encoder.17} parent=1 // pred_region
      %80 = dma.done [#allocation3], 256
    $region17: #{transformer_encoder.17} parent=1 // pred_fallthru
      _
    %81 = vsyncpa [#allocation3], 1

// kernel: transformer_encoder.12
$region0: #{transformer_encoder.12}
  #allocation0 [shape = 'u32[]', space=smem, size = 0x4, offset = 0x4, fixed_abs, tag = 'smem constant byte address 0x4 - core index']
  #allocation1 [shape = 'u32[72,128]{1,0:T(1,128)}', space=vmem, size = 0x9000, scoped, tag = 'internal scratch']
  #allocation2 [shape = 'bf16[16,32]{1,0:T(8,128)(2,1)}', space=vmem, size = 0x1000, scoped, tag = 'scratch operand']
  #allocation3 [shape = 'f32[16,32]{1,0:T(8,128)}', space=vmem, size = 0x2000, scoped, tag = 'scratch operand']
  %s0 = inlined_call_operand.vmem [shape: f32[16,32], index: 0, kind: input, shape index: {}, may-alias: {0,9}]
  %s1 = inlined_call_operand.vmem [shape: f32[1,32], index: 1, kind: input, shape index: {}]
  %s2 = inlined_call_operand.vmem [shape: bf16[32,64], index: 2, kind: input, shape index: {}]
  %s3 = inlined_call_operand.vmem [shape: f32[1,64], index: 3, kind: input, shape index: {}]
  %s4 = inlined_call_operand.vmem [shape: bf16[32,64], index: 4, kind: input, shape index: {}]
  %s5 = inlined_call_operand.vmem [shape: f32[1,64], index: 5, kind: input, shape index: {}]
  %s6 = inlined_call_operand.vmem [shape: bf16[64,32], index: 6, kind: input, shape index: {}]
  %s7 = inlined_call_operand.vmem [shape: f32[1,32], index: 7, kind: input, shape index: {}]
  %s8 = inlined_call_operand.vmem [shape: f32[1,32], index: 8, kind: input, shape index: {}]
  %s9 = inlined_call_operand.vmem [shape: f32[16,32], index: 9, kind: output, shape index: {}, may-alias: {0,9}]
  %s10 = sld [smem:[#allocation0]]
  $region54: #{transformer_encoder.12} parent=0
    _
  %s12 = ssub.s32 1, %s10
  %s13 = scalar_select 0, %s12, %s10
  // Predicated region
  $region2: #{transformer_encoder.12} parent=0 // pred_check
    _
  $region3: #{transformer_encoder.12} parent=0 // pred_check_branch
    %15 = sbr.rel (0) target = $region5
  $region4: #{transformer_encoder.12} parent=0 // pred_region
    _
  $region5: #{transformer_encoder.12} parent=0 // pred_fallthru
    _
  // Predicated region
  $region6: #{transformer_encoder.12} parent=0 // pred_check
    _
  $region7: #{transformer_encoder.12} parent=0 // pred_check_branch
    %17 = sbr.rel (0) target = $region9
  $region8: #{transformer_encoder.12} parent=0 // pred_region
    _
  $region9: #{transformer_encoder.12} parent=0 // pred_fallthru
    _
  // Predicated region
  $region10: #{transformer_encoder.12} parent=0 // pred_check
    _
  $region11: #{transformer_encoder.12} parent=0 // pred_check_branch
    %19 = sbr.rel (0) target = $region13
  $region12: #{transformer_encoder.12} parent=0 // pred_region
    _
  $region13: #{transformer_encoder.12} parent=0 // pred_fallthru
    _
  // Predicated region
  $region14: #{transformer_encoder.12} parent=0 // pred_check
    _
  $region15: #{transformer_encoder.12} parent=0 // pred_check_branch
    %21 = sbr.rel (0) target = $region17
  $region16: #{transformer_encoder.12} parent=0 // pred_region
    _
  $region17: #{transformer_encoder.12} parent=0 // pred_fallthru
    _
  // Predicated region
  $region18: #{transformer_encoder.12} parent=0 // pred_check
    _
  $region19: #{transformer_encoder.12} parent=0 // pred_check_branch
    %23 = sbr.rel (0) target = $region21
  $region20: #{transformer_encoder.12} parent=0 // pred_region
    _
  $region21: #{transformer_encoder.12} parent=0 // pred_fallthru
    _
  // Predicated region
  $region22: #{transformer_encoder.12} parent=0 // pred_check
    _
  $region23: #{transformer_encoder.12} parent=0 // pred_check_branch
    %25 = sbr.rel (0) target = $region25
  $region24: #{transformer_encoder.12} parent=0 // pred_region
    _
  $region25: #{transformer_encoder.12} parent=0 // pred_fallthru
    _
  // Predicated region
  $region26: #{transformer_encoder.12} parent=0 // pred_check
    _
  $region27: #{transformer_encoder.12} parent=0 // pred_check_branch
    %27 = sbr.rel (0) target = $region29
  $region28: #{transformer_encoder.12} parent=0 // pred_region
    _
  $region29: #{transformer_encoder.12} parent=0 // pred_fallthru
    _
  // Predicated region
  $region30: #{transformer_encoder.12} parent=0 // pred_check
    _
  $region31: #{transformer_encoder.12} parent=0 // pred_check_branch
    %29 = sbr.rel (0) target = $region33
  $region32: #{transformer_encoder.12} parent=0 // pred_region
    _
  $region33: #{transformer_encoder.12} parent=0 // pred_fallthru
    _
  // Predicated region
  $region34: #{transformer_encoder.12} parent=0 // pred_check
    _
  $region35: #{transformer_encoder.12} parent=0 // pred_check_branch
    %31 = sbr.rel (0) target = $region37
  $region36: #{transformer_encoder.12} parent=0 // pred_region
    _
  $region37: #{transformer_encoder.12} parent=0 // pred_fallthru
    _
  %p33 = scmp.eq.s32.totalorder 0, 0
  // Predicated region
  $region38: #{transformer_encoder.12} parent=0 // pred_check
    %p34 = pneg %p33
  $region39: #{transformer_encoder.12} parent=0 // pred_check_branch
    %36 = sbr.rel (%p34) target = $region41
  $region40: #{transformer_encoder.12} parent=0 // pred_region
    %v37 = vld [vmem:[%s0] sm:$0xff]
    %v38 = vld [vmem:[%s0 + $0x8] sm:$0xff]
    %v39 = vmul.f32 %v37, %v37
    %v40 = vmul.f32 %v38, %v38
    %vm41 = vcmask 261120
    %v42 = vsel %vm41, %v39, 0.0
    %43 = vadd.xlane.f32.xlu0 %v42
    %v44 = vpop.xlane.xlu0 %43
    %v45 = vsel %vm41, %v40, 0.0
    %46 = vadd.xlane.f32.xlu0 %v45
    %v47 = vpop.xlane.xlu0 %46
    %v48 = vrcp.pop 32.0
    %v49 = vmul.f32 32.0, %v48
    %v50 = vsub.f32 1.0, %v49
    %v51 = vmul.f32 %v48, %v50
    %v52 = vadd.f32 %v48, %v51
    %vm53 = vweird.f32 %v48
    %v54 = vsel %vm53, %v48, %v52
    %v55 = vmul.f32 %v44, %v54
    %v56 = vmul.f32 %v47, %v54
    %v57 = vadd.f32 %v55, 1e-06
    %v58 = vadd.f32 %v56, 1e-06
    %v59 = vrsqrt.pop %v57
    %v60 = vmul.f32 %v59, %v57
    %v61 = vmul.f32 %v60, %v59
    %v62 = vmul.f32 0.5, %v61
    %v63 = vsub.f32 1.5, %v62
    %v64 = vmul.f32 %v59, %v63
    %vm65 = vweird.f32 %v57
    %vm66 = vweird.f32 %v59
    %vm67 = vmor %vm65, %vm66
    %v68 = vsel %vm67, %v59, %v64
    %v69 = vrsqrt.pop %v58
    %v70 = vmul.f32 %v69, %v58
    %v71 = vmul.f32 %v70, %v69
    %v72 = vmul.f32 0.5, %v71
    %v73 = vsub.f32 1.5, %v72
    %v74 = vmul.f32 %v69, %v73
    %vm75 = vweird.f32 %v58
    %vm76 = vweird.f32 %v69
    %vm77 = vmor %vm75, %vm76
    %v78 = vsel %vm77, %v69, %v74
    %v79 = vmul.f32 %v37, %v68
    %v80 = vmul.f32 %v38, %v78
    %v81 = vld [vmem:[%s1] sm:$0x1]
    %v83 = vperm.slane %v81, 0
    %v85 = vmul.f32 %v79, %v83
    %v86 = vmul.f32 %v80, %v83
    %v87 = vpack.c.bf16 %v85, %v85
    %v88 = vpack.c.bf16 %v86, %v86
    %vm89 = vcmask 257024
    %90 = vst.msk [vmem:[#allocation2] sm:$0xf] %vm89, %v87
    %91 = vst.msk [vmem:[#allocation2 + $0x4] sm:$0xf] %vm89, %v88
    %92 = vst.msk [vmem:[#allocation3] sm:$0xff] %vm41, 0.0
    %93 = vst.msk [vmem:[#allocation3 + $0x8] sm:$0xff] %vm41, 0.0
  $region41: #{transformer_encoder.12} parent=0 // pred_fallthru
    _
  %v94 = vld [vmem:[#allocation2] sm:$0xf]
  %v95 = vld [vmem:[#allocation2 + $0x4] sm:$0xf]
  %v96 = vld [vmem:[%s2] sm:$0xf]
  %v97 = vld [vmem:[%s2 + $0x4] sm:$0xf]
  %v98 = vld [vmem:[%s2 + $0x8] sm:$0xf]
  %v99 = vld [vmem:[%s2 + $0xc] sm:$0xf]
  %v100 = vld [vmem:[%s3] sm:$0x1]
  %v102 = vperm.slane %v100, 0
  %v106 = vunpack.c.l.b16 %v94
  %v107 = vunpack.c.l.b16 %v95
  %v108 = vpack.c.b16 %v107, %v106
  %v113 = vunpack.c.l.b16 %v96
  %v114 = vunpack.c.l.b16 %v97
  %v115 = vunpack.c.l.b16 %v98
  %v116 = vunpack.c.l.b16 %v99
  %v117 = vpack.c.b16 %v114, %v113
  %v118 = vpack.c.b16 %v116, %v115
  %vm121 = vcmask 261120
  %v123 = vsel %vm121, %v108, 0
  %125 = vmatpush.bf16.msra.mxu0 0
  %126 = vmatpush.bf16.msra.mxu0 0
  %127 = vmatpush.bf16.msra.mxu0 0
  %128 = vmatpush.bf16.msra.mxu0 0
  %129 = vmatpush.bf16.msra.mxu0 0
  %130 = vmatpush.bf16.msra.mxu0 0
  %131 = vmatpush.bf16.msra.mxu0 %v118
  %132 = vmatpush.bf16.msra.mxu0 %v117
  %133 = vmatmul.bf16.gmra.mxu0 %v123
  %v134 = vpop.f32.mrf.mxu0
  %v135 = vadd.f32 %v102, %v134
  %v136 = vpop.f32.mrf.mxu0
  %v137 = vadd.f32 %v102, %v136
  %138 = vdwg.mxu0
  %v139 = vld [vmem:[%s4] sm:$0xf]
  %v140 = vld [vmem:[%s4 + $0x4] sm:$0xf]
  %v141 = vld [vmem:[%s4 + $0x8] sm:$0xf]
  %v142 = vld [vmem:[%s4 + $0xc] sm:$0xf]
  %v143 = vld [vmem:[%s5] sm:$0x1]
  %v145 = vperm.slane %v143, 0
  %v151 = vunpack.c.l.b16 %v139
  %v152 = vunpack.c.l.b16 %v140
  %v153 = vunpack.c.l.b16 %v141
  %v154 = vunpack.c.l.b16 %v142
  %v155 = vpack.c.b16 %v152, %v151
  %v156 = vpack.c.b16 %v154, %v153
  %159 = vmatpush.bf16.msra.mxu0 0
  %160 = vmatpush.bf16.msra.mxu0 0
  %161 = vmatpush.bf16.msra.mxu0 0
  %162 = vmatpush.bf16.msra.mxu0 0
  %163 = vmatpush.bf16.msra.mxu0 0
  %164 = vmatpush.bf16.msra.mxu0 0
  %165 = vmatpush.bf16.msra.mxu0 %v156
  %166 = vmatpush.bf16.msra.mxu0 %v155
  %167 = vmatmul.bf16.gmra.mxu0 %v123
  %v168 = vpop.f32.mrf.mxu0
  %v169 = vadd.f32 %v145, %v168
  %v170 = vpop.f32.mrf.mxu0
  %v171 = vadd.f32 %v145, %v170
  %172 = vdwg.mxu0
  %v173 = vxor.u32 %v169, 2147483648
  %v174 = vxor.u32 %v171, 2147483648
  %v175 = vmul.f32 %v173, 1.442695
  %v176 = vpow.pop %v175
  %v177 = vmul.f32 %v174, 1.442695
  %v178 = vpow.pop %v177
  %v179 = vadd.f32 %v176, 1.0
  %v180 = vadd.f32 %v178, 1.0
  %v181 = vrcp.pop %v179
  %v182 = vmul.f32 %v179, %v181
  %v183 = vsub.f32 1.0, %v182
  %v184 = vmul.f32 %v181, %v183
  %v185 = vadd.f32 %v181, %v184
  %vm186 = vweird.f32 %v179
  %vm187 = vweird.f32 %v181
  %vm188 = vmor %vm186, %vm187
  %v189 = vsel %vm188, %v181, %v185
  %v190 = vand.u32 2147483647, %v179
  %vm191 = vcmp.eq.f32.partialorder %v190, 8.507059e+37
  %v192 = vand.u32 %v179, 2147483648
  %v193 = vor.u32 1.1754944e-38, %v192
  %v194 = vsel %vm191, %v193, %v189
  %v195 = vmul.f32 1.0, %v194
  %v196 = vrcp.pop %v180
  %v197 = vmul.f32 %v180, %v196
  %v198 = vsub.f32 1.0, %v197
  %v199 = vmul.f32 %v196, %v198
  %v200 = vadd.f32 %v196, %v199
  %vm201 = vweird.f32 %v180
  %vm202 = vweird.f32 %v196
  %vm203 = vmor %vm201, %vm202
  %v204 = vsel %vm203, %v196, %v200
  %v205 = vand.u32 2147483647, %v180
  %vm206 = vcmp.eq.f32.partialorder %v205, 8.507059e+37
  %v207 = vand.u32 %v180, 2147483648
  %v208 = vor.u32 1.1754944e-38, %v207
  %v209 = vsel %vm206, %v208, %v204
  %v210 = vmul.f32 1.0, %v209
  %v211 = vmul.f32 %v135, %v195
  %v212 = vmul.f32 %v137, %v210
  %v213 = vpack.c.bf16 %v212, %v211
  %v214 = vld [vmem:[#allocation3] sm:$0xff]
  %v215 = vld [vmem:[#allocation3 + $0x8] sm:$0xff]
  %v216 = vld [vmem:[%s6] sm:$0xf]
  %v217 = vld [vmem:[%s6 + $0x4] sm:$0xf]
  %v218 = vld [vmem:[%s6 + $0x8] sm:$0xf]
  %v219 = vld [vmem:[%s6 + $0xc] sm:$0xf]
  %v220 = vld [vmem:[%s6 + $0x10] sm:$0xf]
  %v221 = vld [vmem:[%s6 + $0x14] sm:$0xf]
  %v222 = vld [vmem:[%s6 + $0x18] sm:$0xf]
  %v223 = vld [vmem:[%s6 + $0x1c] sm:$0xf]
  %v232 = vunpack.c.l.b16 %v216
  %v233 = vunpack.c.l.b16 %v217
  %v234 = vunpack.c.l.b16 %v218
  %v235 = vunpack.c.l.b16 %v219
  %v236 = vunpack.c.l.b16 %v220
  %v237 = vunpack.c.l.b16 %v221
  %v238 = vunpack.c.l.b16 %v222
  %v239 = vunpack.c.l.b16 %v223
  %v240 = vpack.c.b16 %v233, %v232
  %v241 = vpack.c.b16 %v235, %v234
  %v242 = vpack.c.b16 %v237, %v236
  %v243 = vpack.c.b16 %v239, %v238
  %vm248 = vcmask 523264
  %v250 = vsel %vm248, %v213, 0
  %252 = vmatpush.bf16.msra.mxu0 0
  %253 = vmatpush.bf16.msra.mxu0 0
  %254 = vmatpush.bf16.msra.mxu0 0
  %255 = vmatpush.bf16.msra.mxu0 0
  %256 = vmatpush.bf16.msra.mxu0 %v243
  %257 = vmatpush.bf16.msra.mxu0 %v242
  %258 = vmatpush.bf16.msra.mxu0 %v241
  %259 = vmatpush.bf16.msra.mxu0 %v240
  %260 = vmatmul.bf16.gmra.mxu0 %v250
  %v261 = vpop.f32.mrf.mxu0
  %v262 = vadd.f32 0.0, %v261
  %v263 = vpop.f32.mrf.mxu0
  %v264 = vadd.f32 0.0, %v263
  %265 = vdwg.mxu0
  %v266 = vadd.f32 %v214, %v262
  %v267 = vadd.f32 %v215, %v264
  %268 = vst.msk [vmem:[#allocation3] sm:$0xff] %vm121, %v266
  %269 = vst.msk [vmem:[#allocation3 + $0x8] sm:$0xff] %vm121, %v267
  // Predicated region
  $region42: #{transformer_encoder.12} parent=0 // pred_check
    %p270 = pneg %p33
  $region43: #{transformer_encoder.12} parent=0 // pred_check_branch
    %272 = sbr.rel (%p270) target = $region45
  $region44: #{transformer_encoder.12} parent=0 // pred_region
    %v273 = vld [vmem:[%s0] sm:$0xff]
    %v274 = vld [vmem:[%s0 + $0x8] sm:$0xff]
    %v275 = vld [vmem:[%s8] sm:$0x1]
    %v276 = vld [vmem:[#allocation3] sm:$0xff]
    %v277 = vld [vmem:[#allocation3 + $0x8] sm:$0xff]
    %v278 = vld [vmem:[%s7] sm:$0x1]
    %v280 = vperm.slane %v278, 0
    %v282 = vadd.f32 %v276, %v280
    %v283 = vadd.f32 %v277, %v280
    %v285 = vperm.slane %v275, 0
    %v287 = vmul.f32 %v285, %v282
    %v288 = vmul.f32 %v285, %v283
    %v289 = vadd.f32 %v273, %v287
    %v290 = vadd.f32 %v274, %v288
    %291 = vst.msk [vmem:[%s9] sm:$0xff] %vm121, %v289
    %292 = vst.msk [vmem:[%s9 + $0x8] sm:$0xff] %vm121, %v290
  $region45: #{transformer_encoder.12} parent=0 // pred_fallthru
    _
  // Predicated region
  $region46: #{transformer_encoder.12} parent=0 // pred_check
    _
  $region47: #{transformer_encoder.12} parent=0 // pred_check_branch
    %294 = sbr.rel (0) target = $region49
  $region48: #{transformer_encoder.12} parent=0 // pred_region
    _
  $region49: #{transformer_encoder.12} parent=0 // pred_fallthru
    _
  // Predicated region
  $region50: #{transformer_encoder.12} parent=0 // pred_check
    _
  $region51: #{transformer_encoder.12} parent=0 // pred_check_branch
    %296 = sbr.rel (0) target = $region53
  $region52: #{transformer_encoder.12} parent=0 // pred_region
    _
  $region53: #{transformer_encoder.12} parent=0 // pred_fallthru
    _

</llo_original>
